<compile_context>
chip_gen: v7x
topology: tpu7x:2x2x1
jax: 0.10.0
libtpu: 0.0.40
codegen_flags: <defaults>
</compile_context>

<pallas_src>
import functools

import jax
import jax.numpy as jnp
from jax.experimental import pallas as pl
from jax.experimental.pallas import tpu as pltpu

_COMPUTE_DTYPE = jnp.float32


# ----------------------------------------------------------------------------- utils
def _round_up(x, m):
    return (x + m - 1) // m * m


def _pick_m_tile(m, cap=1024):
    """Large multiple-of-8 row tile; caller pads m up to a multiple of it."""
    t = min(cap, m)
    t = max(8, t - t % 8)
    return t


def _pick_image_row_tile(ho, wo, cap_rows=1024):
    """Rows-per-tile for the dilated conv (th divides ho, th*wo <= cap)."""
    cands = [th for th in range(1, ho + 1) if ho % th == 0 and th * wo <= cap_rows]
    if not cands:
        return ho
    aligned = [th for th in cands if (th * wo) % 8 == 0]
    return max(aligned) if aligned else max(cands)


# ------------------------------------------------------------------- conv1: matmul + stats
def _conv_matmul_stats_kernel(p_ref, w_ref, o_ref, st_ref):
    # p_ref: (TM, K) im2col rows; w_ref: (K, Cp); o_ref: (TM, Cp) raw conv out
    # st_ref: (8, Cp) per-tile partial stats: row 0 = sum, row 1 = sum of squares.
    acc = jnp.dot(p_ref[...].astype(_COMPUTE_DTYPE),
                  w_ref[...].astype(_COMPUTE_DTYPE),
                  preferred_element_type=jnp.float32)
    o_ref[...] = acc
    r = jax.lax.broadcasted_iota(jnp.int32, st_ref.shape, 0)
    s = jnp.sum(acc, axis=0, keepdims=True)
    sq = jnp.sum(acc * acc, axis=0, keepdims=True)
    st_ref[...] = jnp.where(r == 0, s, 0.0) + jnp.where(r == 1, sq, 0.0)


def _conv_matmul_stats(patches, w):
    m, k = patches.shape
    cp = w.shape[1]
    tm = _pick_m_tile(m)
    mp = _round_up(m, tm)
    if mp != m:
        patches = jnp.pad(patches, ((0, mp - m), (0, 0)))  # zero rows: no effect on stats
    nt = mp // tm
    return pl.pallas_call(
        _conv_matmul_stats_kernel,
        out_shape=(jax.ShapeDtypeStruct((mp, cp), jnp.float32),
                   jax.ShapeDtypeStruct((nt, 8, cp), jnp.float32)),
        grid=(nt,),
        in_specs=[pl.BlockSpec((tm, k), lambda i: (i, 0)),
                  pl.BlockSpec((k, cp), lambda i: (0, 0))],
        out_specs=(pl.BlockSpec((tm, cp), lambda i: (i, 0)),
                   pl.BlockSpec((None, 8, cp), lambda i: (i, 0, 0))),
        compiler_params=pltpu.CompilerParams(dimension_semantics=("parallel",)),
    )(patches, w)


# ------------------------------------- conv2: fused BN1+ReLU+pad, dilated conv, BN2 stats
def _dilated_conv_stats_kernel(x_ref, w_ref, sc_ref, sh_ref, o_ref, st_ref,
                               xpad_ref, lhs_ref, *,
                               kh_total, kw_total, dil, th, ho, wo, pad):
    # x_ref:   (Ho, Wo, Cp)  raw conv1 output for image b (fetched once per b)
    # w_ref:   (KH, KW*Cp, Cp) full conv2 weights, VMEM-resident (constant index_map)
    # sc/sh:   (1, Cp)        folded BN1 scale / shift
    # o_ref:   (th*wo, Cp)    conv2 accumulator (revisited across the kh grid axis)
    # st_ref:  (8, Cp)        per-(b, row-tile) partial BN2 stats
    # xpad_ref:(Hp, Wp, Cp)   scratch: padded relu(bn1(conv1)) image, built once per b
    # lhs_ref: (th*wo, KW*Cp) scratch: im2col LHS for one tap row
    t = pl.program_id(1)
    kh = pl.program_id(2)
    cp = o_ref.shape[-1]

    # Build the padded, normalized conv1 activation once per image.
    @pl.when(jnp.logical_and(t == 0, kh == 0))
    def _():
        xpad_ref[...] = jnp.zeros_like(xpad_ref)
        xpad_ref[pad:pad + ho, pad:pad + wo, :] = jnp.maximum(
            x_ref[...] * sc_ref[...] + sh_ref[...], 0.0)

    # im2col LHS for tap row kh: one K = KW*Cp matmul per step (MXU does the reduction).
    row0 = t * th + dil * kh                      # first padded input row for this tap row
    rows = xpad_ref[pl.ds(row0, th), :, :]        # (th, Wp, Cp)
    for kw in range(kw_total):                    # static unroll: 10 window copies
        win = rows[:, dil * kw: dil * kw + wo, :]                 # (th, wo, Cp)
        lhs_ref[:, kw * cp:(kw + 1) * cp] = (
            win.reshape(th * wo, cp).astype(lhs_ref.dtype))

    contrib = jnp.dot(lhs_ref[...], w_ref[kh],    # (th*wo, KW*Cp) x (KW*Cp, Cp)
                      preferred_element_type=jnp.float32)

    @pl.when(kh == 0)
    def _():
        o_ref[...] = jnp.zeros_like(o_ref)

    o_ref[...] += contrib

    @pl.when(kh == kh_total - 1)
    def _():
        y = o_ref[...]
        r = jax.lax.broadcasted_iota(jnp.int32, st_ref.shape, 0)
        s = jnp.sum(y, axis=0, keepdims=True)
        sq = jnp.sum(y * y, axis=0, keepdims=True)
        st_ref[...] = jnp.where(r == 0, s, 0.0) + jnp.where(r == 1, sq, 0.0)


def _dilated_conv_stats(y1raw, w, sc, sh, ho, wo, cp, *,
                        kh_total=10, kw_total=10, dil=2, pad=9):
    n = y1raw.shape[0]
    hp, wp = ho + 2 * pad, wo + 2 * pad
    th = _pick_image_row_tile(ho, wo)
    nrt = ho // th
    g = n * nrt
    kernel = functools.partial(_dilated_conv_stats_kernel,
                               kh_total=kh_total, kw_total=kw_total,
                               dil=dil, th=th, ho=ho, wo=wo, pad=pad)
    return pl.pallas_call(
        kernel,
        out_shape=(jax.ShapeDtypeStruct((g, th * wo, cp), jnp.float32),
                   jax.ShapeDtypeStruct((g, 8, cp), jnp.float32)),
        grid=(n, nrt, kh_total),
        in_specs=[
            # whole raw conv1 image for batch b (re-fetched only when b changes)
            pl.BlockSpec((None, ho, wo, cp), lambda b, t, kh: (b, 0, 0, 0)),
            # full conv2 weights, constant index -> stays resident in VMEM
            pl.BlockSpec((kh_total, kw_total * cp, cp), lambda b, t, kh: (0, 0, 0)),
            pl.BlockSpec((1, cp), lambda b, t, kh: (0, 0)),
            pl.BlockSpec((1, cp), lambda b, t, kh: (0, 0)),
        ],
        out_specs=(
            # 3-D slabs: last two dims are full-extent, so any th*wo is legal
            pl.BlockSpec((None, th * wo, cp), lambda b, t, kh: (b * nrt + t, 0, 0)),
            pl.BlockSpec((None, 8, cp), lambda b, t, kh: (b * nrt + t, 0, 0)),
        ),
        scratch_shapes=[
            pltpu.VMEM((hp, wp, cp), jnp.float32),             # padded BN1(conv1) image
            pltpu.VMEM((th * wo, kw_total * cp), _COMPUTE_DTYPE),  # im2col LHS
        ],
        compiler_params=pltpu.CompilerParams(
            # b parallel (megacore over N); t/kh arbitrary so the per-image scratch
            # init at (t==0, kh==0) and the kh accumulation stay on one core in order.
            dimension_semantics=("parallel", "arbitrary", "arbitrary"),
            vmem_limit_bytes=64 * 1024 * 1024),
    )(y1raw, w, sc, sh)


# ----------------------------------------------------------- BN finalize (JAX) + apply pass
def _bn_scale_shift(stats, m_total, gamma, beta, cp, eps=1e-5):
    # stats: (G, 8, Cp); row 0 = sum, row 1 = sum of squares.
    s = jnp.sum(stats[:, 0, :], axis=0)
    sq = jnp.sum(stats[:, 1, :], axis=0)
    mean = s / m_total
    var = jnp.maximum(sq / m_total - mean * mean, 0.0)
    g = jnp.pad(gamma.reshape(-1), (0, cp - gamma.size))
    b = jnp.pad(beta.reshape(-1), (0, cp - beta.size))
    scale = g * jax.lax.rsqrt(var + eps)
    shift = b - mean * scale
    return scale.reshape(1, cp).astype(jnp.float32), shift.reshape(1, cp).astype(jnp.float32)


def _bn_relu_kernel(x_ref, scale_ref, shift_ref, o_ref):
    o_ref[...] = jnp.maximum(x_ref[...] * scale_ref[...] + shift_ref[...], 0.0)


def _bn_relu_apply(x, scale, shift):
    m, cp = x.shape
    tm = _pick_m_tile(m)
    mp = _round_up(m, tm)
    xp = jnp.pad(x, ((0, mp - m), (0, 0))) if mp != m else x
    y = pl.pallas_call(
        _bn_relu_kernel,
        out_shape=jax.ShapeDtypeStruct((mp, cp), jnp.float32),
        grid=(mp // tm,),
        in_specs=[pl.BlockSpec((tm, cp), lambda i: (i, 0)),
                  pl.BlockSpec((1, cp), lambda i: (0, 0)),
                  pl.BlockSpec((1, cp), lambda i: (0, 0))],
        out_specs=pl.BlockSpec((tm, cp), lambda i: (i, 0)),
        input_output_aliases={0: 0},   # normalize the raw conv output in place
        compiler_params=pltpu.CompilerParams(dimension_semantics=("parallel",)),
    )(xp, scale, shift)
    return y[:m]


# --------------------------------------------------------------------------- forward pass
def init_params(key, cin, cout):
    ks = jax.random.split(key, 8)
    p = {}
    # Conv1: k=2, stride=2 (weights stored HWIO; PyTorch OIHW would need a transpose).
    p["w1"] = jax.random.normal(ks[0], (2, 2, cin, cout), jnp.float32) * 0.1
    p["b1"] = jax.random.normal(ks[1], (cout,), jnp.float32) * 0.01  # cancels under train-mode BN
    p["g1"] = 1.0 + 0.1 * jax.random.normal(ks[2], (cout,), jnp.float32)
    p["be1"] = 0.01 * jax.random.normal(ks[3], (cout,), jnp.float32)
    # Conv2 (Singleconv): k=10, pad=9, dilation=2.
    p["w2"] = jax.random.normal(ks[4], (10, 10, cout, cout), jnp.float32) * 0.02
    p["b2"] = jax.random.normal(ks[5], (cout,), jnp.float32) * 0.01  # cancels under train-mode BN
    p["g2"] = 1.0 + 0.1 * jax.random.normal(ks[6], (cout,), jnp.float32)
    p["be2"] = 0.01 * jax.random.normal(ks[7], (cout,), jnp.float32)
    return p


def encode_forward(x_nchw, params):
    x = x_nchw.astype(jnp.float32)
    N, Cin, H, W = x.shape
    Cout = params["w1"].shape[-1]
    Ho, Wo = H // 2, W // 2
    Cp = _round_up(Cout, 128)          # lane-dense channel padding
    # TODO(synk): for very small Cout (8-32) the 128-lane padding inflates HBM traffic /
    # FLOPs; a masked-store narrow-channel variant is a measured trade-off not taken here.
    M = N * Ho * Wo

    # ---- Conv1 (k=2, s=2): space-to-depth im2col (pure permutation) + one tiled matmul.
    patches1 = (x.reshape(N, Cin, Ho, 2, Wo, 2)
                 .transpose(0, 2, 4, 3, 5, 1)            # (N, Ho, Wo, kh, kw, ci)
                 .reshape(M, 4 * Cin))
    w1p = jnp.pad(params["w1"].reshape(4 * Cin, Cout), ((0, 0), (0, Cp - Cout)))
    y1raw, st1 = _conv_matmul_stats(patches1, w1p)       # (Mp, Cp), (nt, 8, Cp)
    sc1, sh1 = _bn_scale_shift(st1, M, params["g1"], params["be1"], Cp)
    y1raw = y1raw[:M].reshape(N, Ho, Wo, Cp)             # free reshape, stays in HBM once

    # ---- Singleconv (k=10, pad=9, dil=2): BN1+ReLU+pad fused into the dilated kernel.
    w2p = jnp.pad(params["w2"], ((0, 0), (0, 0), (0, Cp - Cout), (0, Cp - Cout)))
    w2p = w2p.reshape(10, 10 * Cp, Cp)                   # (KH, KW*Cp_in, Cp_out)
    y2raw, st2 = _dilated_conv_stats(y1raw, w2p, sc1, sh1, Ho, Wo, Cp)
    sc2, sh2 = _bn_scale_shift(st2, M, params["g2"], params["be2"], Cp)
    y2 = _bn_relu_apply(y2raw.reshape(M, Cp), sc2, sh2)  # (M, Cp)

    y2 = y2.reshape(N, Ho, Wo, Cp)[..., :Cout]
    return jnp.transpose(y2, (0, 3, 1, 2))               # back to NCHW


# --------------------------------------------------------------------- pure-JAX reference
def _reference_forward(x_nchw, params):
    # Keeps the conv biases: training-mode BN makes them cancel, so matching this
    # reference validates the bias-dropping done in the Pallas path.
    def conv_bn_relu(x, w_hwio, bias, gamma, beta, *, stride, dilation, padding):
        y = jax.lax.conv_general_dilated(
            x, w_hwio, window_strides=(stride, stride),
            padding=((padding, padding), (padding, padding)),
            rhs_dilation=(dilation, dilation),
            dimension_numbers=("NCHW", "HWIO", "NCHW"))
        y = y + bias.reshape(1, -1, 1, 1)
        mean = jnp.mean(y, axis=(0, 2, 3), keepdims=True)
        var = jnp.mean((y - mean) ** 2, axis=(0, 2, 3), keepdims=True)
        y = (y - mean) * jax.lax.rsqrt(var + 1e-5)
        y = y * gamma.reshape(1, -1, 1, 1) + beta.reshape(1, -1, 1, 1)
        return jnp.maximum(y, 0.0)

    y1 = conv_bn_relu(x_nchw, params["w1"], params["b1"], params["g1"], params["be1"],
                      stride=2, dilation=1, padding=0)
    return conv_bn_relu(y1, params["w2"], params["b2"], params["g2"], params["be2"],
                        stride=1, dilation=2, padding=9)


if __name__ == "__main__":
    key = jax.random.PRNGKey(0)
    k_x, k_p = jax.random.split(key)

    N, Cin, H, W = 2, 4, 16, 16
    Cout = 8
    x = jax.random.normal(k_x, (N, Cin, H, W), jnp.float32)
    params = init_params(k_p, Cin, Cout)

    out = jax.jit(encode_forward)(x, params)
    out = jax.block_until_ready(out)

    assert out.shape == (N, Cout, H // 2, W // 2), out.shape
    assert bool(jnp.all(jnp.isfinite(out)))
    assert bool(jnp.all(out >= 0.0))  # ReLU output

    ref = _reference_forward(x, params)
    max_err = float(jnp.max(jnp.abs(out - ref)))
    assert max_err < 1e-3, f"mismatch vs reference: {max_err}"

    print("KERNEL_OK")
</pallas_src>

<mosaic_0001>
module attributes {stable_mosaic.version = 11 : i64} {
  func.func @_conv_matmul_stats_kernel(%arg0: i32, %arg1: memref<128x16xf32, #tpu.memory_space<vmem>>, %arg2: memref<16x128xf32, #tpu.memory_space<vmem>>, %arg3: memref<128x128xf32, #tpu.memory_space<vmem>>, %arg4: memref<1x8x128xf32, #tpu.memory_space<vmem>>) attributes {dimension_semantics = [#tpu.dimension_semantics<parallel>], iteration_bounds = array<i64: 1>, scalar_prefetch = 0 : i64, scratch_operands = 0 : i64, tpu.core_type = #tpu.core_type<tc>, window_params = [{transform_indices = @transform_0, window_bounds = array<i64: 128, 16>}, {pipeline_mode = #tpu.pipeline_mode<synchronous>, transform_indices = @transform_1, window_bounds = array<i64: 16, 128>}, {transform_indices = @transform_2, window_bounds = array<i64: 128, 128>}, {transform_indices = @transform_3, window_bounds = array<i64: 1, 8, 128>}]} {
    %c0 = arith.constant 0 : index
    %c0_0 = arith.constant 0 : index
    %0 = vector.load %arg1[%c0, %c0_0] : memref<128x16xf32, #tpu.memory_space<vmem>>, vector<128x16xf32>
    %c0_1 = arith.constant 0 : index
    %c0_2 = arith.constant 0 : index
    %1 = vector.load %arg2[%c0_1, %c0_2] : memref<16x128xf32, #tpu.memory_space<vmem>>, vector<16x128xf32>
    %cst = arith.constant dense<0.000000e+00> : vector<128x128xf32>
    %2 = tpu.matmul %0, %1, %cst {dimension_numbers = #tpu.dot_dimension_numbers<[1], [0], [0], [1], [0, 0, 1, 1], [], []>} : vector<128x16xf32>, vector<16x128xf32>, vector<128x128xf32> -> vector<128x128xf32>
    %c0_3 = arith.constant 0 : index
    %c0_4 = arith.constant 0 : index
    %3 = vector.load %arg3[%c0_3, %c0_4] : memref<128x128xf32, #tpu.memory_space<vmem>>, vector<128x128xf32>
    tpu.vector_store %arg3[%c0_3, %c0_4], %2 {strides = array<i32>} : memref<128x128xf32, #tpu.memory_space<vmem>>, vector<128x128xf32>,
    %4 = tpu.iota {dimensions = array<i32: 0>} : vector<8x128xi32>
    %cst_5 = arith.constant dense<0.000000e+00> : vector<128xf32>
    %5 = vector.multi_reduction <add>, %2, %cst_5 [0] : vector<128x128xf32> to vector<128xf32>
    %6 = vector.shape_cast %5 : vector<128xf32> to vector<1x128xf32>
    %7 = arith.mulf %2, %2 : vector<128x128xf32>
    %cst_6 = arith.constant dense<0.000000e+00> : vector<128xf32>
    %8 = vector.multi_reduction <add>, %7, %cst_6 [0] : vector<128x128xf32> to vector<128xf32>
    %9 = vector.shape_cast %8 : vector<128xf32> to vector<1x128xf32>
    %c0_i32 = arith.constant 0 : i32
    %10 = vector.broadcast %c0_i32 : i32 to vector<8x128xi32>
    %11 = arith.cmpi eq, %4, %10 : vector<8x128xi32>
    %cst_7 = arith.constant 0.000000e+00 : f32
    %12 = vector.shape_cast %6 : vector<1x128xf32> to vector<1x128xf32>
    %13 = vector.broadcast %12 : vector<1x128xf32> to vector<8x128xf32>
    %14 = vector.broadcast %cst_7 : f32 to vector<8x128xf32>
    %15 = arith.select %11, %13, %14 : vector<8x128xi1>, vector<8x128xf32>
    %c1_i32 = arith.constant 1 : i32
    %16 = vector.broadcast %c1_i32 : i32 to vector<8x128xi32>
    %17 = arith.cmpi eq, %4, %16 : vector<8x128xi32>
    %cst_8 = arith.constant 0.000000e+00 : f32
    %18 = vector.shape_cast %9 : vector<1x128xf32> to vector<1x128xf32>
    %19 = vector.broadcast %18 : vector<1x128xf32> to vector<8x128xf32>
    %20 = vector.broadcast %cst_8 : f32 to vector<8x128xf32>
    %21 = arith.select %17, %19, %20 : vector<8x128xi1>, vector<8x128xf32>
    %22 = arith.addf %15, %21 : vector<8x128xf32>
    %c0_9 = arith.constant 0 : index
    %c0_10 = arith.constant 0 : index
    %c0_11 = arith.constant 0 : index
    %23 = vector.load %arg4[%c0_9, %c0_10, %c0_11] : memref<1x8x128xf32, #tpu.memory_space<vmem>>, vector<1x8x128xf32>
    %24 = vector.shape_cast %23 : vector<1x8x128xf32> to vector<8x128xf32>
    %25 = vector.shape_cast %22 : vector<8x128xf32> to vector<1x8x128xf32>
    tpu.vector_store %arg4[%c0_9, %c0_10, %c0_11], %25 {strides = array<i32>} : memref<1x8x128xf32, #tpu.memory_space<vmem>>, vector<1x8x128xf32>,
    return
  }
  func.func @transform_0(%arg0: i32) -> (i32, i32) {
    %c0_i32 = arith.constant 0 : i32
    %c0_i32_0 = arith.constant 0 : i32
    return %arg0, %c0_i32 : i32, i32
  }
  func.func @transform_1(%arg0: i32) -> (i32, i32) {
    %c0_i32 = arith.constant 0 : i32
    %c0_i32_0 = arith.constant 0 : i32
    %c0_i32_1 = arith.constant 0 : i32
    return %c0_i32, %c0_i32_0 : i32, i32
  }
  func.func @transform_2(%arg0: i32) -> (i32, i32) {
    %c0_i32 = arith.constant 0 : i32
    %c0_i32_0 = arith.constant 0 : i32
    return %arg0, %c0_i32 : i32, i32
  }
  func.func @transform_3(%arg0: i32) -> (i32, i32, i32) {
    %c0_i32 = arith.constant 0 : i32
    %c0_i32_0 = arith.constant 0 : i32
    %c0_i32_1 = arith.constant 0 : i32
    return %arg0, %c0_i32, %c0_i32_0 : i32, i32, i32
  }
}

module attributes {stable_mosaic.version = 11 : i64} {
  func.func @_dilated_conv_stats_kernel(%arg0: i32, %arg1: i32, %arg2: i32, %arg3: memref<1x8x8x128xf32, #tpu.memory_space<vmem>>, %arg4: memref<10x1280x128xf32, #tpu.memory_space<vmem>>, %arg5: memref<1x128xf32, #tpu.memory_space<vmem>>, %arg6: memref<1x128xf32, #tpu.memory_space<vmem>>, %arg7: memref<1x64x128xf32, #tpu.memory_space<vmem>>, %arg8: memref<1x8x128xf32, #tpu.memory_space<vmem>>, %arg9: memref<26x26x128xf32, #tpu.memory_space<vmem>>, %arg10: memref<64x1280xf32, #tpu.memory_space<vmem>>) attributes {dimension_semantics = [#tpu.dimension_semantics<parallel>, #tpu.dimension_semantics<arbitrary>, #tpu.dimension_semantics<arbitrary>], iteration_bounds = array<i64: 2, 1, 10>, scalar_prefetch = 0 : i64, scratch_operands = 2 : i64, tpu.core_type = #tpu.core_type<tc>, window_params = [{transform_indices = @transform_0, window_bounds = array<i64: 1, 8, 8, 128>}, {pipeline_mode = #tpu.pipeline_mode<synchronous>, transform_indices = @transform_1, window_bounds = array<i64: 10, 1280, 128>}, {pipeline_mode = #tpu.pipeline_mode<synchronous>, transform_indices = @transform_2, window_bounds = array<i64: 1, 128>}, {pipeline_mode = #tpu.pipeline_mode<synchronous>, transform_indices = @transform_3, window_bounds = array<i64: 1, 128>}, {transform_indices = @transform_4, window_bounds = array<i64: 1, 64, 128>}, {transform_indices = @transform_5, window_bounds = array<i64: 1, 8, 128>}]} {
    %c0_i32 = arith.constant 0 : i32
    %0 = arith.cmpi eq, %arg1, %c0_i32 : i32
    %c0_i32_0 = arith.constant 0 : i32
    %1 = arith.cmpi eq, %arg2, %c0_i32_0 : i32
    %2 = arith.andi %0, %1 : i1
    %3 = arith.extui %2 : i1 to i32
    %c0_i32_1 = arith.constant 0 : i32
    %4 = arith.cmpi ne, %3, %c0_i32_1 : i32
    scf.if %4 {
      %cst_27 = arith.constant 0.000000e+00 : f32
      %57 = vector.broadcast %cst_27 : f32 to vector<26x26x128xf32>
      %c0_28 = arith.constant 0 : index
      %c0_29 = arith.constant 0 : index
      %c0_30 = arith.constant 0 : index
      %58 = vector.load %arg9[%c0_28, %c0_29, %c0_30] : memref<26x26x128xf32, #tpu.memory_space<vmem>>, vector<26x26x128xf32>
      tpu.vector_store %arg9[%c0_28, %c0_29, %c0_30], %57 {strides = array<i32>} : memref<26x26x128xf32, #tpu.memory_space<vmem>>, vector<26x26x128xf32>,
      %c0_31 = arith.constant 0 : index
      %c0_32 = arith.constant 0 : index
      %c0_33 = arith.constant 0 : index
      %c0_34 = arith.constant 0 : index
      %59 = vector.load %arg3[%c0_31, %c0_32, %c0_33, %c0_34] : memref<1x8x8x128xf32, #tpu.memory_space<vmem>>, vector<1x8x8x128xf32>
      %60 = vector.shape_cast %59 : vector<1x8x8x128xf32> to vector<8x8x128xf32>
      %c0_35 = arith.constant 0 : index
      %c0_36 = arith.constant 0 : index
      %61 = vector.load %arg5[%c0_35, %c0_36] : memref<1x128xf32, #tpu.memory_space<vmem>>, vector<1x128xf32>
      %62 = vector.shape_cast %61 : vector<1x128xf32> to vector<1x1x128xf32>
      %63 = vector.broadcast %62 : vector<1x1x128xf32> to vector<8x8x128xf32>
      %64 = arith.mulf %60, %63 : vector<8x8x128xf32>
      %c0_37 = arith.constant 0 : index
      %c0_38 = arith.constant 0 : index
      %65 = vector.load %arg6[%c0_37, %c0_38] : memref<1x128xf32, #tpu.memory_space<vmem>>, vector<1x128xf32>
      %66 = vector.shape_cast %65 : vector<1x128xf32> to vector<1x1x128xf32>
      %67 = vector.broadcast %66 : vector<1x1x128xf32> to vector<8x8x128xf32>
      %68 = arith.addf %64, %67 : vector<8x8x128xf32>
      %cst_39 = arith.constant 0.000000e+00 : f32
      %69 = vector.broadcast %cst_39 : f32 to vector<8x8x128xf32>
      %70 = arith.maximumf %68, %69 : vector<8x8x128xf32>
      %c9 = arith.constant 9 : index
      %c9_40 = arith.constant 9 : index
      %c0_41 = arith.constant 0 : index
      %71 = vector.load %arg9[%c9, %c9_40, %c0_41] : memref<26x26x128xf32, #tpu.memory_space<vmem>>, vector<8x8x128xf32>
      tpu.vector_store %arg9[%c9, %c9_40, %c0_41], %70 {strides = array<i32>} : memref<26x26x128xf32, #tpu.memory_space<vmem>>, vector<8x8x128xf32>,
    } else {
    }
    %c8_i32 = arith.constant 8 : i32
    %5 = arith.muli %arg1, %c8_i32 : i32
    %c2_i32 = arith.constant 2 : i32
    %6 = arith.muli %c2_i32, %arg2 : i32
    %7 = arith.addi %5, %6 : i32
    %8 = arith.index_cast %7 : i32 to index
    %c0 = arith.constant 0 : index
    %c0_2 = arith.constant 0 : index
    %9 = vector.load %arg9[%8, %c0, %c0_2] : memref<26x26x128xf32, #tpu.memory_space<vmem>>, vector<8x26x128xf32>
    %10 = vector.extract_strided_slice %9 {offsets = [0, 0, 0], sizes = [8, 8, 128], strides = [1, 1, 1]} : vector<8x26x128xf32> to vector<8x8x128xf32>
    %11 = vector.shape_cast %10 : vector<8x8x128xf32> to vector<64x128xf32>
    %c0_3 = arith.constant 0 : index
    %c0_4 = arith.constant 0 : index
    %12 = vector.load %arg10[%c0_3, %c0_4] : memref<64x1280xf32, #tpu.memory_space<vmem>>, vector<64x128xf32>
    tpu.vector_store %arg10[%c0_3, %c0_4], %11 {strides = array<i32>} : memref<64x1280xf32, #tpu.memory_space<vmem>>, vector<64x128xf32>,
    %13 = vector.extract_strided_slice %9 {offsets = [0, 2, 0], sizes = [8, 8, 128], strides = [1, 1, 1]} : vector<8x26x128xf32> to vector<8x8x128xf32>
    %14 = vector.shape_cast %13 : vector<8x8x128xf32> to vector<64x128xf32>
    %c0_5 = arith.constant 0 : index
    %c128 = arith.constant 128 : index
    %15 = vector.load %arg10[%c0_5, %c128] : memref<64x1280xf32, #tpu.memory_space<vmem>>, vector<64x128xf32>
    tpu.vector_store %arg10[%c0_5, %c128], %14 {strides = array<i32>} : memref<64x1280xf32, #tpu.memory_space<vmem>>, vector<64x128xf32>,
    %16 = vector.extract_strided_slice %9 {offsets = [0, 4, 0], sizes = [8, 8, 128], strides = [1, 1, 1]} : vector<8x26x128xf32> to vector<8x8x128xf32>
    %17 = vector.shape_cast %16 : vector<8x8x128xf32> to vector<64x128xf32>
    %c0_6 = arith.constant 0 : index
    %c256 = arith.constant 256 : index
    %18 = vector.load %arg10[%c0_6, %c256] : memref<64x1280xf32, #tpu.memory_space<vmem>>, vector<64x128xf32>
    tpu.vector_store %arg10[%c0_6, %c256], %17 {strides = array<i32>} : memref<64x1280xf32, #tpu.memory_space<vmem>>, vector<64x128xf32>,
    %19 = vector.extract_strided_slice %9 {offsets = [0, 6, 0], sizes = [8, 8, 128], strides = [1, 1, 1]} : vector<8x26x128xf32> to vector<8x8x128xf32>
    %20 = vector.shape_cast %19 : vector<8x8x128xf32> to vector<64x128xf32>
    %c0_7 = arith.constant 0 : index
    %c384 = arith.constant 384 : index
    %21 = vector.load %arg10[%c0_7, %c384] : memref<64x1280xf32, #tpu.memory_space<vmem>>, vector<64x128xf32>
    tpu.vector_store %arg10[%c0_7, %c384], %20 {strides = array<i32>} : memref<64x1280xf32, #tpu.memory_space<vmem>>, vector<64x128xf32>,
    %22 = vector.extract_strided_slice %9 {offsets = [0, 8, 0], sizes = [8, 8, 128], strides = [1, 1, 1]} : vector<8x26x128xf32> to vector<8x8x128xf32>
    %23 = vector.shape_cast %22 : vector<8x8x128xf32> to vector<64x128xf32>
    %c0_8 = arith.constant 0 : index
    %c512 = arith.constant 512 : index
    %24 = vector.load %arg10[%c0_8, %c512] : memref<64x1280xf32, #tpu.memory_space<vmem>>, vector<64x128xf32>
    tpu.vector_store %arg10[%c0_8, %c512], %23 {strides = array<i32>} : memref<64x1280xf32, #tpu.memory_space<vmem>>, vector<64x128xf32>,
    %25 = vector.extract_strided_slice %9 {offsets = [0, 10, 0], sizes = [8, 8, 128], strides = [1, 1, 1]} : vector<8x26x128xf32> to vector<8x8x128xf32>
    %26 = vector.shape_cast %25 : vector<8x8x128xf32> to vector<64x128xf32>
    %c0_9 = arith.constant 0 : index
    %c640 = arith.constant 640 : index
    %27 = vector.load %arg10[%c0_9, %c640] : memref<64x1280xf32, #tpu.memory_space<vmem>>, vector<64x128xf32>
    tpu.vector_store %arg10[%c0_9, %c640], %26 {strides = array<i32>} : memref<64x1280xf32, #tpu.memory_space<vmem>>, vector<64x128xf32>,
    %28 = vector.extract_strided_slice %9 {offsets = [0, 12, 0], sizes = [8, 8, 128], strides = [1, 1, 1]} : vector<8x26x128xf32> to vector<8x8x128xf32>
    %29 = vector.shape_cast %28 : vector<8x8x128xf32> to vector<64x128xf32>
    %c0_10 = arith.constant 0 : index
    %c768 = arith.constant 768 : index
    %30 = vector.load %arg10[%c0_10, %c768] : memref<64x1280xf32, #tpu.memory_space<vmem>>, vector<64x128xf32>
    tpu.vector_store %arg10[%c0_10, %c768], %29 {strides = array<i32>} : memref<64x1280xf32, #tpu.memory_space<vmem>>, vector<64x128xf32>,
    %31 = vector.extract_strided_slice %9 {offsets = [0, 14, 0], sizes = [8, 8, 128], strides = [1, 1, 1]} : vector<8x26x128xf32> to vector<8x8x128xf32>
    %32 = vector.shape_cast %31 : vector<8x8x128xf32> to vector<64x128xf32>
    %c0_11 = arith.constant 0 : index
    %c896 = arith.constant 896 : index
    %33 = vector.load %arg10[%c0_11, %c896] : memref<64x1280xf32, #tpu.memory_space<vmem>>, vector<64x128xf32>
    tpu.vector_store %arg10[%c0_11, %c896], %32 {strides = array<i32>} : memref<64x1280xf32, #tpu.memory_space<vmem>>, vector<64x128xf32>,
    %34 = vector.extract_strided_slice %9 {offsets = [0, 16, 0], sizes = [8, 8, 128], strides = [1, 1, 1]} : vector<8x26x128xf32> to vector<8x8x128xf32>
    %35 = vector.shape_cast %34 : vector<8x8x128xf32> to vector<64x128xf32>
    %c0_12 = arith.constant 0 : index
    %c1024 = arith.constant 1024 : index
    %36 = vector.load %arg10[%c0_12, %c1024] : memref<64x1280xf32, #tpu.memory_space<vmem>>, vector<64x128xf32>
    tpu.vector_store %arg10[%c0_12, %c1024], %35 {strides = array<i32>} : memref<64x1280xf32, #tpu.memory_space<vmem>>, vector<64x128xf32>,
    %37 = vector.extract_strided_slice %9 {offsets = [0, 18, 0], sizes = [8, 8, 128], strides = [1, 1, 1]} : vector<8x26x128xf32> to vector<8x8x128xf32>
    %38 = vector.shape_cast %37 : vector<8x8x128xf32> to vector<64x128xf32>
    %c0_13 = arith.constant 0 : index
    %c1152 = arith.constant 1152 : index
    %39 = vector.load %arg10[%c0_13, %c1152] : memref<64x1280xf32, #tpu.memory_space<vmem>>, vector<64x128xf32>
    tpu.vector_store %arg10[%c0_13, %c1152], %38 {strides = array<i32>} : memref<64x1280xf32, #tpu.memory_space<vmem>>, vector<64x128xf32>,
    %c0_14 = arith.constant 0 : index
    %c0_15 = arith.constant 0 : index
    %40 = vector.load %arg10[%c0_14, %c0_15] : memref<64x1280xf32, #tpu.memory_space<vmem>>, vector<64x1280xf32>
    %41 = arith.index_cast %arg2 : i32 to index
    %c0_16 = arith.constant 0 : index
    %c0_17 = arith.constant 0 : index
    %42 = vector.load %arg4[%41, %c0_16, %c0_17] : memref<10x1280x128xf32, #tpu.memory_space<vmem>>, vector<1x1280x128xf32>
    %43 = vector.shape_cast %42 : vector<1x1280x128xf32> to vector<1280x128xf32>
    %cst = arith.constant dense<0.000000e+00> : vector<64x128xf32>
    %44 = tpu.matmul %40, %43, %cst {dimension_numbers = #tpu.dot_dimension_numbers<[1], [0], [0], [1], [0, 0, 1, 1], [], []>} : vector<64x1280xf32>, vector<1280x128xf32>, vector<64x128xf32> -> vector<64x128xf32>
    %c0_i32_18 = arith.constant 0 : i32
    %45 = arith.cmpi eq, %arg2, %c0_i32_18 : i32
    %46 = arith.extui %45 : i1 to i32
    %c0_i32_19 = arith.constant 0 : i32
    %47 = arith.cmpi ne, %46, %c0_i32_19 : i32
    scf.if %47 {
      %cst_27 = arith.constant 0.000000e+00 : f32
      %57 = vector.broadcast %cst_27 : f32 to vector<64x128xf32>
      %c0_28 = arith.constant 0 : index
      %c0_29 = arith.constant 0 : index
      %c0_30 = arith.constant 0 : index
      %58 = vector.load %arg7[%c0_28, %c0_29, %c0_30] : memref<1x64x128xf32, #tpu.memory_space<vmem>>, vector<1x64x128xf32>
      %59 = vector.shape_cast %58 : vector<1x64x128xf32> to vector<64x128xf32>
      %60 = vector.shape_cast %57 : vector<64x128xf32> to vector<1x64x128xf32>
      tpu.vector_store %arg7[%c0_28, %c0_29, %c0_30], %60 {strides = array<i32>} : memref<1x64x128xf32, #tpu.memory_space<vmem>>, vector<1x64x128xf32>,
    } else {
    }
    %c0_20 = arith.constant 0 : index
    %c0_21 = arith.constant 0 : index
    %c0_22 = arith.constant 0 : index
    %48 = vector.load %arg7[%c0_20, %c0_21, %c0_22] : memref<1x64x128xf32, #tpu.memory_space<vmem>>, vector<1x64x128xf32>
    %49 = vector.shape_cast %48 : vector<1x64x128xf32> to vector<64x128xf32>
    %50 = arith.addf %49, %44 : vector<64x128xf32>
    %c0_23 = arith.constant 0 : index
    %c0_24 = arith.constant 0 : index
    %c0_25 = arith.constant 0 : index
    %51 = vector.load %arg7[%c0_23, %c0_24, %c0_25] : memref<1x64x128xf32, #tpu.memory_space<vmem>>, vector<1x64x128xf32>
    %52 = vector.shape_cast %51 : vector<1x64x128xf32> to vector<64x128xf32>
    %53 = vector.shape_cast %50 : vector<64x128xf32> to vector<1x64x128xf32>
    tpu.vector_store %arg7[%c0_23, %c0_24, %c0_25], %53 {strides = array<i32>} : memref<1x64x128xf32, #tpu.memory_space<vmem>>, vector<1x64x128xf32>,
    %c9_i32 = arith.constant 9 : i32
    %54 = arith.cmpi eq, %arg2, %c9_i32 : i32
    %55 = arith.extui %54 : i1 to i32
    %c0_i32_26 = arith.constant 0 : i32
    %56 = arith.cmpi ne, %55, %c0_i32_26 : i32
    scf.if %56 {
      %c0_27 = arith.constant 0 : index
      %c0_28 = arith.constant 0 : index
      %c0_29 = arith.constant 0 : index
      %57 = vector.load %arg7[%c0_27, %c0_28, %c0_29] : memref<1x64x128xf32, #tpu.memory_space<vmem>>, vector<1x64x128xf32>
      %58 = vector.shape_cast %57 : vector<1x64x128xf32> to vector<64x128xf32>
      %59 = tpu.iota {dimensions = array<i32: 0>} : vector<8x128xi32>
      %cst_30 = arith.constant dense<0.000000e+00> : vector<128xf32>
      %60 = vector.multi_reduction <add>, %58, %cst_30 [0] : vector<64x128xf32> to vector<128xf32>
      %61 = vector.shape_cast %60 : vector<128xf32> to vector<1x128xf32>
      %62 = arith.mulf %58, %58 : vector<64x128xf32>
      %cst_31 = arith.constant dense<0.000000e+00> : vector<128xf32>
      %63 = vector.multi_reduction <add>, %62, %cst_31 [0] : vector<64x128xf32> to vector<128xf32>
      %64 = vector.shape_cast %63 : vector<128xf32> to vector<1x128xf32>
      %c0_i32_32 = arith.constant 0 : i32
      %65 = vector.broadcast %c0_i32_32 : i32 to vector<8x128xi32>
      %66 = arith.cmpi eq, %59, %65 : vector<8x128xi32>
      %cst_33 = arith.constant 0.000000e+00 : f32
      %67 = vector.shape_cast %61 : vector<1x128xf32> to vector<1x128xf32>
      %68 = vector.broadcast %67 : vector<1x128xf32> to vector<8x128xf32>
      %69 = vector.broadcast %cst_33 : f32 to vector<8x128xf32>
      %70 = arith.select %66, %68, %69 : vector<8x128xi1>, vector<8x128xf32>
      %c1_i32 = arith.constant 1 : i32
      %71 = vector.broadcast %c1_i32 : i32 to vector<8x128xi32>
      %72 = arith.cmpi eq, %59, %71 : vector<8x128xi32>
      %cst_34 = arith.constant 0.000000e+00 : f32
      %73 = vector.shape_cast %64 : vector<1x128xf32> to vector<1x128xf32>
      %74 = vector.broadcast %73 : vector<1x128xf32> to vector<8x128xf32>
      %75 = vector.broadcast %cst_34 : f32 to vector<8x128xf32>
      %76 = arith.select %72, %74, %75 : vector<8x128xi1>, vector<8x128xf32>
      %77 = arith.addf %70, %76 : vector<8x128xf32>
      %c0_35 = arith.constant 0 : index
      %c0_36 = arith.constant 0 : index
      %c0_37 = arith.constant 0 : index
      %78 = vector.load %arg8[%c0_35, %c0_36, %c0_37] : memref<1x8x128xf32, #tpu.memory_space<vmem>>, vector<1x8x128xf32>
      %79 = vector.shape_cast %78 : vector<1x8x128xf32> to vector<8x128xf32>
      %80 = vector.shape_cast %77 : vector<8x128xf32> to vector<1x8x128xf32>
      tpu.vector_store %arg8[%c0_35, %c0_36, %c0_37], %80 {strides = array<i32>} : memref<1x8x128xf32, #tpu.memory_space<vmem>>, vector<1x8x128xf32>,
    } else {
    }
    return
  }
  func.func @transform_0(%arg0: i32, %arg1: i32, %arg2: i32) -> (i32, i32, i32, i32) {
    %c0_i32 = arith.constant 0 : i32
    %c0_i32_0 = arith.constant 0 : i32
    %c0_i32_1 = arith.constant 0 : i32
    %c0_i32_2 = arith.constant 0 : i32
    return %arg0, %c0_i32, %c0_i32_0, %c0_i32_1 : i32, i32, i32, i32
  }
  func.func @transform_1(%arg0: i32, %arg1: i32, %arg2: i32) -> (i32, i32, i32) {
    %c0_i32 = arith.constant 0 : i32
    %c0_i32_0 = arith.constant 0 : i32
    %c0_i32_1 = arith.constant 0 : i32
    %c0_i32_2 = arith.constant 0 : i32
    return %c0_i32, %c0_i32_0, %c0_i32_1 : i32, i32, i32
  }
  func.func @transform_2(%arg0: i32, %arg1: i32, %arg2: i32) -> (i32, i32) {
    %c0_i32 = arith.constant 0 : i32
    %c0_i32_0 = arith.constant 0 : i32
    %c0_i32_1 = arith.constant 0 : i32
    return %c0_i32, %c0_i32_0 : i32, i32
  }
  func.func @transform_3(%arg0: i32, %arg1: i32, %arg2: i32) -> (i32, i32) {
    %c0_i32 = arith.constant 0 : i32
    %c0_i32_0 = arith.constant 0 : i32
    %c0_i32_1 = arith.constant 0 : i32
    return %c0_i32, %c0_i32_0 : i32, i32
  }
  func.func @transform_4(%arg0: i32, %arg1: i32, %arg2: i32) -> (i32, i32, i32) {
    %c1_i32 = arith.constant 1 : i32
    %0 = arith.muli %arg0, %c1_i32 : i32
    %1 = arith.addi %0, %arg1 : i32
    %c0_i32 = arith.constant 0 : i32
    %c0_i32_0 = arith.constant 0 : i32
    %c0_i32_1 = arith.constant 0 : i32
    return %1, %c0_i32, %c0_i32_0 : i32, i32, i32
  }
  func.func @transform_5(%arg0: i32, %arg1: i32, %arg2: i32) -> (i32, i32, i32) {
    %c1_i32 = arith.constant 1 : i32
    %0 = arith.muli %arg0, %c1_i32 : i32
    %1 = arith.addi %0, %arg1 : i32
    %c0_i32 = arith.constant 0 : i32
    %c0_i32_0 = arith.constant 0 : i32
    %c0_i32_1 = arith.constant 0 : i32
    return %1, %c0_i32, %c0_i32_0 : i32, i32, i32
  }
}

module attributes {stable_mosaic.version = 11 : i64} {
  func.func @_bn_relu_kernel(%arg0: i32, %arg1: memref<128x128xf32, #tpu.memory_space<vmem>>, %arg2: memref<1x128xf32, #tpu.memory_space<vmem>>, %arg3: memref<1x128xf32, #tpu.memory_space<vmem>>, %arg4: memref<128x128xf32, #tpu.memory_space<vmem>>) attributes {dimension_semantics = [#tpu.dimension_semantics<parallel>], iteration_bounds = array<i64: 1>, scalar_prefetch = 0 : i64, scratch_operands = 0 : i64, tpu.core_type = #tpu.core_type<tc>, window_params = [{transform_indices = @transform_0, window_bounds = array<i64: 128, 128>}, {pipeline_mode = #tpu.pipeline_mode<synchronous>, transform_indices = @transform_1, window_bounds = array<i64: 1, 128>}, {pipeline_mode = #tpu.pipeline_mode<synchronous>, transform_indices = @transform_2, window_bounds = array<i64: 1, 128>}, {transform_indices = @transform_3, window_bounds = array<i64: 128, 128>}]} {
    %c0 = arith.constant 0 : index
    %c0_0 = arith.constant 0 : index
    %0 = vector.load %arg1[%c0, %c0_0] : memref<128x128xf32, #tpu.memory_space<vmem>>, vector<128x128xf32>
    %c0_1 = arith.constant 0 : index
    %c0_2 = arith.constant 0 : index
    %1 = vector.load %arg2[%c0_1, %c0_2] : memref<1x128xf32, #tpu.memory_space<vmem>>, vector<1x128xf32>
    %2 = vector.broadcast %1 : vector<1x128xf32> to vector<128x128xf32>
    %3 = arith.mulf %0, %2 : vector<128x128xf32>
    %c0_3 = arith.constant 0 : index
    %c0_4 = arith.constant 0 : index
    %4 = vector.load %arg3[%c0_3, %c0_4] : memref<1x128xf32, #tpu.memory_space<vmem>>, vector<1x128xf32>
    %5 = vector.broadcast %4 : vector<1x128xf32> to vector<128x128xf32>
    %6 = arith.addf %3, %5 : vector<128x128xf32>
    %cst = arith.constant 0.000000e+00 : f32
    %7 = vector.broadcast %cst : f32 to vector<128x128xf32>
    %8 = arith.maximumf %6, %7 : vector<128x128xf32>
    %c0_5 = arith.constant 0 : index
    %c0_6 = arith.constant 0 : index
    %9 = vector.load %arg4[%c0_5, %c0_6] : memref<128x128xf32, #tpu.memory_space<vmem>>, vector<128x128xf32>
    tpu.vector_store %arg4[%c0_5, %c0_6], %8 {strides = array<i32>} : memref<128x128xf32, #tpu.memory_space<vmem>>, vector<128x128xf32>,
    return
  }
  func.func @transform_0(%arg0: i32) -> (i32, i32) {
    %c0_i32 = arith.constant 0 : i32
    %c0_i32_0 = arith.constant 0 : i32
    return %arg0, %c0_i32 : i32, i32
  }
  func.func @transform_1(%arg0: i32) -> (i32, i32) {
    %c0_i32 = arith.constant 0 : i32
    %c0_i32_0 = arith.constant 0 : i32
    %c0_i32_1 = arith.constant 0 : i32
    return %c0_i32, %c0_i32_0 : i32, i32
  }
  func.func @transform_2(%arg0: i32) -> (i32, i32) {
    %c0_i32 = arith.constant 0 : i32
    %c0_i32_0 = arith.constant 0 : i32
    %c0_i32_1 = arith.constant 0 : i32
    return %c0_i32, %c0_i32_0 : i32, i32
  }
  func.func @transform_3(%arg0: i32) -> (i32, i32) {
    %c0_i32 = arith.constant 0 : i32
    %c0_i32_0 = arith.constant 0 : i32
    return %arg0, %c0_i32 : i32, i32
  }
}

</mosaic_0001>

<llo_original>
// kernel: encode_forward.3
$region0: #{encode_forward.3}
  #allocation0 [shape = 'u32[]', space=smem, size = 0x4, offset = 0x4, fixed_abs, tag = 'smem constant byte address 0x4 - core index']
  #allocation1 [shape = 'u32[144,128]{1,0:T(1,128)}', space=vmem, size = 0x12000, scoped, tag = 'internal scratch']
  %s0 = inlined_call_operand.vmem [shape: f32[128,16], index: 0, kind: input, shape index: {}]
  %s1 = inlined_call_operand.vmem [shape: f32[16,128], index: 1, kind: input, shape index: {}]
  %s2 = inlined_call_operand.hbm [shape: f32[128,128], index: 2, kind: output, shape index: {0}]
  %s3 = inlined_call_operand.vmem [shape: f32[1,8,128], index: 3, kind: output, shape index: {1}]
  %4 = xla_tuple %s2, %s3
  %s5 = sld [smem:[#allocation0]]
  $region26: #{encode_forward.3} parent=0
    _
  %s7 = ssub.s32 1, %s5
  %s8 = scalar_select 0, %s7, %s5
  $region1: #{encode_forward.3} parent=0
    #allocation2 [shape = 'u8[65536]{0}', space=vmem, size = 0x10000, scoped, tag = 'output window, operand 0, single buffered']
    #allocation3 [shape = 's32[1]{0}', space=sflag, size = 0x4, scoped, tag = 'scoped memory for encode_forward.3']
    %9 = vsyncpa [#allocation3], 0
    // Predicated region
    $region2: #{encode_forward.3} parent=1 // pred_check
      _
    $region3: #{encode_forward.3} parent=1 // pred_check_branch
      %11 = sbr.rel (0) target = $region5
    $region4: #{encode_forward.3} parent=1 // pred_region
      _
    $region5: #{encode_forward.3} parent=1 // pred_fallthru
      _
    // Predicated region
    $region6: #{encode_forward.3} parent=1 // pred_check
      _
    $region7: #{encode_forward.3} parent=1 // pred_check_branch
      %13 = sbr.rel (0) target = $region9
    $region8: #{encode_forward.3} parent=1 // pred_region
      _
    $region9: #{encode_forward.3} parent=1 // pred_fallthru
      _
    %v14 = vld [vmem:[%s0] sm:$0xff]
    %v15 = vld [vmem:[%s0 + $0x8] sm:$0xff]
    %v16 = vld [vmem:[%s0 + $0x10] sm:$0xff]
    %v17 = vld [vmem:[%s0 + $0x18] sm:$0xff]
    %v18 = vld [vmem:[%s0 + $0x20] sm:$0xff]
    %v19 = vld [vmem:[%s0 + $0x28] sm:$0xff]
    %v20 = vld [vmem:[%s0 + $0x30] sm:$0xff]
    %v21 = vld [vmem:[%s0 + $0x38] sm:$0xff]
    %v22 = vld [vmem:[%s0 + $0x40] sm:$0xff]
    %v23 = vld [vmem:[%s0 + $0x48] sm:$0xff]
    %v24 = vld [vmem:[%s0 + $0x50] sm:$0xff]
    %v25 = vld [vmem:[%s0 + $0x58] sm:$0xff]
    %v26 = vld [vmem:[%s0 + $0x60] sm:$0xff]
    %v27 = vld [vmem:[%s0 + $0x68] sm:$0xff]
    %v28 = vld [vmem:[%s0 + $0x70] sm:$0xff]
    %v29 = vld [vmem:[%s0 + $0x78] sm:$0xff]
    %v30 = vld [vmem:[%s1] sm:$0xff]
    %v31 = vld [vmem:[%s1 + $0x8] sm:$0xff]
    %vm32 = vcmask 130048
    %v34 = vsel %vm32, %v14, 0
    %v37 = vsel %vm32, %v15, 0
    %v40 = vsel %vm32, %v16, 0
    %v43 = vsel %vm32, %v17, 0
    %v46 = vsel %vm32, %v18, 0
    %v49 = vsel %vm32, %v19, 0
    %v52 = vsel %vm32, %v20, 0
    %v55 = vsel %vm32, %v21, 0
    %v58 = vsel %vm32, %v22, 0
    %v61 = vsel %vm32, %v23, 0
    %v64 = vsel %vm32, %v24, 0
    %v67 = vsel %vm32, %v25, 0
    %v70 = vsel %vm32, %v26, 0
    %v73 = vsel %vm32, %v27, 0
    %v76 = vsel %vm32, %v28, 0
    %v79 = vsel %vm32, %v29, 0
    %81 = vmatprep.subr.mxu0 0.0
    %82 = vmatpush1.msra.mxu0 %v30
    %83 = vmatprep.subr.mxu0 0.0
    %84 = vmatpush1.msra.mxu0 %v31
    %85 = vmatprep.subr.mxu0 0.0
    %86 = vmatpush1.msra.mxu0 0.0
    %87 = vmatprep.subr.mxu0 0.0
    %88 = vmatpush1.msra.mxu0 0.0
    %89 = vmatprep.subr.mxu0 0.0
    %90 = vmatpush1.msra.mxu0 0.0
    %91 = vmatprep.subr.mxu0 0.0
    %92 = vmatpush1.msra.mxu0 0.0
    %93 = vmatprep.subr.mxu0 0.0
    %94 = vmatpush1.msra.mxu0 0.0
    %95 = vmatprep.subr.mxu0 0.0
    %96 = vmatpush1.msra.mxu0 0.0
    %97 = vmatprep.subr.mxu0 0.0
    %98 = vmatpush1.msra.mxu0 0.0
    %99 = vmatprep.subr.mxu0 0.0
    %100 = vmatpush1.msra.mxu0 0.0
    %101 = vmatprep.subr.mxu0 0.0
    %102 = vmatpush1.msra.mxu0 0.0
    %103 = vmatprep.subr.mxu0 0.0
    %104 = vmatpush1.msra.mxu0 0.0
    %105 = vmatprep.subr.mxu0 0.0
    %106 = vmatpush1.msra.mxu0 0.0
    %107 = vmatprep.subr.mxu0 0.0
    %108 = vmatpush1.msra.mxu0 0.0
    %109 = vmatprep.subr.mxu0 0.0
    %110 = vmatpush1.msra.mxu0 0.0
    %111 = vmatprep.subr.mxu0 0.0
    %112 = vmatpush1.msra.mxu0 0.0
    %113 = vmatprep.subr.mxu0 0.0
    %114 = vmatpush1.msra.mxu0 0.0
    %115 = vmatprep.subr.mxu0 0.0
    %116 = vmatpush1.msra.mxu0 0.0
    %117 = vmatprep.subr.mxu0 0.0
    %118 = vmatpush1.msra.mxu0 0.0
    %119 = vmatprep.subr.mxu0 0.0
    %120 = vmatpush1.msra.mxu0 0.0
    %121 = vmatprep.subr.mxu0 0.0
    %122 = vmatpush1.msra.mxu0 0.0
    %123 = vmatprep.subr.mxu0 0.0
    %124 = vmatpush1.msra.mxu0 0.0
    %125 = vmatprep.subr.mxu0 0.0
    %126 = vmatpush1.msra.mxu0 0.0
    %127 = vmatprep.subr.mxu0 0.0
    %128 = vmatpush1.msra.mxu0 0.0
    %129 = vmatprep.subr.mxu0 0.0
    %130 = vmatpush1.msra.mxu0 0.0
    %131 = vmatprep.subr.mxu0 0.0
    %132 = vmatpush1.msra.mxu0 0.0
    %133 = vmatprep.subr.mxu0 0.0
    %134 = vmatpush1.msra.mxu0 0.0
    %135 = vmatprep.subr.mxu0 0.0
    %136 = vmatpush1.msra.mxu0 0.0
    %137 = vmatprep.subr.mxu0 0.0
    %138 = vmatpush1.msra.mxu0 0.0
    %139 = vmatprep.subr.mxu0 0.0
    %140 = vmatpush1.msra.mxu0 0.0
    %141 = vmatprep.subr.mxu0 0.0
    %142 = vmatpush1.msra.mxu0 0.0
    %143 = vmatprep.subr.mxu0 0.0
    %144 = vmatpush1.msra.mxu0 0.0
    %145 = vmatprep.mubr.f32.mxu0 0.0
    %146 = vmatmul.mubr.f32.gmra.mrb[0].mxu0 %v34
    %v147 = vpop.f32.mrb[0].mxu0
    %v148 = vadd.f32 0.0, %v147
    %v149 = vpop.f32.mrb[0].mxu0
    %150 = vmatprep.mubr.f32.mxu0 0.0
    %151 = vmatmul.mubr.f32.gmra.mrb[0].mxu0 %v37
    %v152 = vpop.f32.mrb[0].mxu0
    %v153 = vadd.f32 0.0, %v152
    %v154 = vpop.f32.mrb[0].mxu0
    %155 = vmatprep.mubr.f32.mxu0 0.0
    %156 = vmatmul.mubr.f32.gmra.mrb[0].mxu0 %v40
    %v157 = vpop.f32.mrb[0].mxu0
    %v158 = vadd.f32 0.0, %v157
    %v159 = vpop.f32.mrb[0].mxu0
    %160 = vmatprep.mubr.f32.mxu0 0.0
    %161 = vmatmul.mubr.f32.gmra.mrb[0].mxu0 %v43
    %v162 = vpop.f32.mrb[0].mxu0
    %v163 = vadd.f32 0.0, %v162
    %v164 = vpop.f32.mrb[0].mxu0
    %165 = vmatprep.mubr.f32.mxu0 0.0
    %166 = vmatmul.mubr.f32.gmra.mrb[0].mxu0 %v46
    %v167 = vpop.f32.mrb[0].mxu0
    %v168 = vadd.f32 0.0, %v167
    %v169 = vpop.f32.mrb[0].mxu0
    %170 = vmatprep.mubr.f32.mxu0 0.0
    %171 = vmatmul.mubr.f32.gmra.mrb[0].mxu0 %v49
    %v172 = vpop.f32.mrb[0].mxu0
    %v173 = vadd.f32 0.0, %v172
    %v174 = vpop.f32.mrb[0].mxu0
    %175 = vmatprep.mubr.f32.mxu0 0.0
    %176 = vmatmul.mubr.f32.gmra.mrb[0].mxu0 %v52
    %v177 = vpop.f32.mrb[0].mxu0
    %v178 = vadd.f32 0.0, %v177
    %v179 = vpop.f32.mrb[0].mxu0
    %180 = vmatprep.mubr.f32.mxu0 0.0
    %181 = vmatmul.mubr.f32.gmra.mrb[0].mxu0 %v55
    %v182 = vpop.f32.mrb[0].mxu0
    %v183 = vadd.f32 0.0, %v182
    %v184 = vpop.f32.mrb[0].mxu0
    %185 = vmatprep.mubr.f32.mxu0 0.0
    %186 = vmatmul.mubr.f32.gmra.mrb[0].mxu0 %v58
    %v187 = vpop.f32.mrb[0].mxu0
    %v188 = vadd.f32 0.0, %v187
    %v189 = vpop.f32.mrb[0].mxu0
    %190 = vmatprep.mubr.f32.mxu0 0.0
    %191 = vmatmul.mubr.f32.gmra.mrb[0].mxu0 %v61
    %v192 = vpop.f32.mrb[0].mxu0
    %v193 = vadd.f32 0.0, %v192
    %v194 = vpop.f32.mrb[0].mxu0
    %195 = vmatprep.mubr.f32.mxu0 0.0
    %196 = vmatmul.mubr.f32.gmra.mrb[0].mxu0 %v64
    %v197 = vpop.f32.mrb[0].mxu0
    %v198 = vadd.f32 0.0, %v197
    %v199 = vpop.f32.mrb[0].mxu0
    %200 = vmatprep.mubr.f32.mxu0 0.0
    %201 = vmatmul.mubr.f32.gmra.mrb[0].mxu0 %v67
    %v202 = vpop.f32.mrb[0].mxu0
    %v203 = vadd.f32 0.0, %v202
    %v204 = vpop.f32.mrb[0].mxu0
    %205 = vmatprep.mubr.f32.mxu0 0.0
    %206 = vmatmul.mubr.f32.gmra.mrb[0].mxu0 %v70
    %v207 = vpop.f32.mrb[0].mxu0
    %v208 = vadd.f32 0.0, %v207
    %v209 = vpop.f32.mrb[0].mxu0
    %210 = vmatprep.mubr.f32.mxu0 0.0
    %211 = vmatmul.mubr.f32.gmra.mrb[0].mxu0 %v73
    %v212 = vpop.f32.mrb[0].mxu0
    %v213 = vadd.f32 0.0, %v212
    %v214 = vpop.f32.mrb[0].mxu0
    %215 = vmatprep.mubr.f32.mxu0 0.0
    %216 = vmatmul.mubr.f32.gmra.mrb[0].mxu0 %v76
    %v217 = vpop.f32.mrb[0].mxu0
    %v218 = vadd.f32 0.0, %v217
    %v219 = vpop.f32.mrb[0].mxu0
    %220 = vmatprep.mubr.f32.mxu0 0.0
    %221 = vmatmul.mubr.f32.gmra.mrb[0].mxu0 %v79
    %v222 = vpop.f32.mrb[0].mxu0
    %v223 = vadd.f32 0.0, %v222
    %v224 = vpop.f32.mrb[0].mxu0
    %225 = vdwg.mxu0
    %226 = vst [vmem:[#allocation2] sm:$0xff] %v148
    %227 = vst [vmem:[#allocation2 + $0x8] sm:$0xff] %v153
    %228 = vst [vmem:[#allocation2 + $0x10] sm:$0xff] %v158
    %229 = vst [vmem:[#allocation2 + $0x18] sm:$0xff] %v163
    %230 = vst [vmem:[#allocation2 + $0x20] sm:$0xff] %v168
    %231 = vst [vmem:[#allocation2 + $0x28] sm:$0xff] %v173
    %232 = vst [vmem:[#allocation2 + $0x30] sm:$0xff] %v178
    %233 = vst [vmem:[#allocation2 + $0x38] sm:$0xff] %v183
    %234 = vst [vmem:[#allocation2 + $0x40] sm:$0xff] %v188
    %235 = vst [vmem:[#allocation2 + $0x48] sm:$0xff] %v193
    %236 = vst [vmem:[#allocation2 + $0x50] sm:$0xff] %v198
    %237 = vst [vmem:[#allocation2 + $0x58] sm:$0xff] %v203
    %238 = vst [vmem:[#allocation2 + $0x60] sm:$0xff] %v208
    %239 = vst [vmem:[#allocation2 + $0x68] sm:$0xff] %v213
    %240 = vst [vmem:[#allocation2 + $0x70] sm:$0xff] %v218
    %241 = vst [vmem:[#allocation2 + $0x78] sm:$0xff] %v223
    %v242 = vlaneseq
    %v243 = vshrl.u32 %v242, 7
    %v244 = vadd.f32 %v148, %v153
    %v245 = vadd.f32 %v244, %v158
    %v246 = vadd.f32 %v245, %v163
    %v247 = vadd.f32 %v246, %v168
    %v248 = vadd.f32 %v247, %v173
    %v249 = vadd.f32 %v248, %v178
    %v250 = vadd.f32 %v249, %v183
    %v251 = vadd.f32 %v250, %v188
    %v252 = vadd.f32 %v251, %v193
    %v253 = vadd.f32 %v252, %v198
    %v254 = vadd.f32 %v253, %v203
    %v255 = vadd.f32 %v254, %v208
    %v256 = vadd.f32 %v255, %v213
    %v257 = vadd.f32 %v256, %v218
    %v258 = vadd.f32 %v257, %v223
    %v259 = vrot.slane %v258, 4
    %v260 = vadd.f32 %v258, %v259
    %v261 = vrot.slane %v260, 2
    %v262 = vadd.f32 %v260, %v261
    %v263 = vrot.slane %v262, 1
    %v264 = vadd.f32 %v262, %v263
    %v265 = vmul.f32 %v148, %v148
    %v266 = vmul.f32 %v153, %v153
    %v267 = vmul.f32 %v158, %v158
    %v268 = vmul.f32 %v163, %v163
    %v269 = vmul.f32 %v168, %v168
    %v270 = vmul.f32 %v173, %v173
    %v271 = vmul.f32 %v178, %v178
    %v272 = vmul.f32 %v183, %v183
    %v273 = vmul.f32 %v188, %v188
    %v274 = vmul.f32 %v193, %v193
    %v275 = vmul.f32 %v198, %v198
    %v276 = vmul.f32 %v203, %v203
    %v277 = vmul.f32 %v208, %v208
    %v278 = vmul.f32 %v213, %v213
    %v279 = vmul.f32 %v218, %v218
    %v280 = vmul.f32 %v223, %v223
    %v281 = vadd.f32 %v265, %v266
    %v282 = vadd.f32 %v281, %v267
    %v283 = vadd.f32 %v282, %v268
    %v284 = vadd.f32 %v283, %v269
    %v285 = vadd.f32 %v284, %v270
    %v286 = vadd.f32 %v285, %v271
    %v287 = vadd.f32 %v286, %v272
    %v288 = vadd.f32 %v287, %v273
    %v289 = vadd.f32 %v288, %v274
    %v290 = vadd.f32 %v289, %v275
    %v291 = vadd.f32 %v290, %v276
    %v292 = vadd.f32 %v291, %v277
    %v293 = vadd.f32 %v292, %v278
    %v294 = vadd.f32 %v293, %v279
    %v295 = vadd.f32 %v294, %v280
    %v296 = vrot.slane %v295, 4
    %v297 = vadd.f32 %v295, %v296
    %v298 = vrot.slane %v297, 2
    %v299 = vadd.f32 %v297, %v298
    %v300 = vrot.slane %v299, 1
    %v301 = vadd.f32 %v299, %v300
    %vm302 = vcmp.eq.s32.totalorder %v243, 0
    %v303 = vsel %vm302, %v264, 0.0
    %vm304 = vcmp.eq.s32.totalorder %v243, 1
    %v305 = vsel %vm304, %v301, 0.0
    %v306 = vadd.f32 %v303, %v305
    %307 = vst [vmem:[%s3] sm:$0xff] %v306
    // Predicated region
    $region10: #{encode_forward.3} parent=1 // pred_check
      _
    $region11: #{encode_forward.3} parent=1 // pred_check_branch
      %309 = sbr.rel (0) target = $region13
    $region12: #{encode_forward.3} parent=1 // pred_region
      %s311 = ssub.s32 2048, 2048
      %312 = vsyncadd [#allocation3], %s311
      %s313 = sshll.u32 [#allocation2], 4
      %s314 = int_to_ptr.vmem [resolvable:$true] %s313
      %319 = dma.vmem_to_hbm [thread:$0]  %s314, 2048, %s2, [#allocation3], 128, 128, 8
    $region13: #{encode_forward.3} parent=1 // pred_fallthru
      _
    // Predicated region
    $region14: #{encode_forward.3} parent=1 // pred_check
      _
    $region15: #{encode_forward.3} parent=1 // pred_check_branch
      %321 = sbr.rel (0) target = $region17
    $region16: #{encode_forward.3} parent=1 // pred_region
      _
    $region17: #{encode_forward.3} parent=1 // pred_fallthru
      _
    // Predicated region
    $region18: #{encode_forward.3} parent=1 // pred_check
      _
    $region19: #{encode_forward.3} parent=1 // pred_check_branch
      %323 = sbr.rel (0) target = $region21
    $region20: #{encode_forward.3} parent=1 // pred_region
      %324 = dma.done [#allocation3], 2048
    $region21: #{encode_forward.3} parent=1 // pred_fallthru
      _
    // Predicated region
    $region22: #{encode_forward.3} parent=1 // pred_check
      _
    $region23: #{encode_forward.3} parent=1 // pred_check_branch
      %326 = sbr.rel (0) target = $region25
    $region24: #{encode_forward.3} parent=1 // pred_region
      _
    $region25: #{encode_forward.3} parent=1 // pred_fallthru
      _
    %327 = vsyncpa [#allocation3], 1

// kernel: encode_forward.4
$region0: #{encode_forward.4}
  #allocation0 [shape = 'u32[]', space=smem, size = 0x4, offset = 0x4, fixed_abs, tag = 'smem constant byte address 0x4 - core index']
  #allocation1 [shape = 'u32[144,128]{1,0:T(1,128)}', space=vmem, size = 0x12000, scoped, tag = 'internal scratch']
  #allocation2 [shape = 'f32[26,26,128]{2,1,0:T(8,128)}', space=vmem, size = 0x68000, scoped, tag = 'scratch operand']
  #allocation3 [shape = 'f32[64,1280]{1,0:T(8,128)}', space=vmem, size = 0x50000, scoped, tag = 'scratch operand']
  %s0 = inlined_call_operand.hbm [shape: f32[2,8,8,128], index: 0, kind: input, shape index: {}]
  %s1 = inlined_call_operand.hbm [shape: f32[10,1280,128], index: 1, kind: input, shape index: {}]
  %s2 = inlined_call_operand.hbm [shape: f32[1,128], index: 2, kind: input, shape index: {}]
  %s3 = inlined_call_operand.hbm [shape: f32[1,128], index: 3, kind: input, shape index: {}]
  %s4 = inlined_call_operand.hbm [shape: f32[2,64,128], index: 4, kind: output, shape index: {0}]
  %s5 = inlined_call_operand.hbm [shape: f32[2,8,128], index: 5, kind: output, shape index: {1}]
  %6 = xla_tuple %s4, %s5
  %s7 = sld [smem:[#allocation0]]
  $region85: #{encode_forward.4} parent=0
    _
  %s9 = ssub.s32 1, %s7
  %s10 = scalar_select 0, %s9, %s7
  $region1: #{encode_forward.4} parent=0
    #allocation4 [shape = 'u8[65536]{0}', space=vmem, size = 0x10000, scoped, tag = 'input window, operand 0']
    #allocation5 [shape = 's32[2]{0}', space=sflag, size = 0x8, scoped, tag = 'scoped memory for encode_forward.4']
    #allocation6 [shape = 's32[2]{0}', space=sflag, size = 0x8, scoped, tag = 'scoped memory for encode_forward.4']
    #allocation7 [shape = 'u8[6553600]{0}', space=vmem, size = 0x640000, scoped, tag = 'input window, operand 1, single buffered']
    #allocation8 [shape = 's32[1]{0}', space=sflag, size = 0x4, scoped, tag = 'scoped memory for encode_forward.4']
    #allocation9 [shape = 'u8[512]{0}', space=vmem, size = 0x400, scoped, tag = 'input window, operand 2, single buffered']
    #allocation10 [shape = 'u8[512]{0}', space=vmem, size = 0x400, scoped, tag = 'input window, operand 3, single buffered']
    #allocation11 [shape = 's32[1]{0}', space=sflag, size = 0x4, scoped, tag = 'scoped memory for encode_forward.4']
    #allocation12 [shape = 'u8[65536]{0}', space=vmem, size = 0x10000, scoped, tag = 'output window, operand 0']
    #allocation13 [shape = 'u8[8192]{0}', space=vmem, size = 0x2000, scoped, tag = 'output window, operand 1']
    #allocation14 [shape = 's32[2]{0}', space=sflag, size = 0x8, scoped, tag = 'scoped memory for encode_forward.4']
    %11 = vsyncpa [#allocation5], 0
    %s12 = scalar_lea.sflag [#allocation5], 1
    %13 = vsyncpa %s12, 0
    %14 = vsyncpa [#allocation8], 0
    %15 = vsyncpa [#allocation11], 0
    %16 = vsyncpa [#allocation6], 0
    %s17 = scalar_lea.sflag [#allocation6], 1
    %18 = vsyncpa %s17, 0
    %19 = vsyncpa [#allocation14], 0
    %s20 = scalar_lea.sflag [#allocation14], 1
    %21 = vsyncpa %s20, 0
    loop: start=0, step=1, limit=22
    $region2: #{encode_forward.4} parent=1 // loop_pre_header
      _
    $region3: #{encode_forward.4} parent=1 // loop_header
      %s23 = sphi 0, %s27
      %p24 = scmp.ge.s32.totalorder %s23, 22
      %s30 = sphi 0, %s49
      %s31 = sphi 0, %s45
      %s32 = sphi 0, %s41
      %s33 = sphi 0, %s30
      %s34 = sphi 0, %s31
      %s35 = sphi 0, %s32
      %s36 = sphi 0, %s33
      %s37 = sphi 0, %s34
      %s38 = sphi 0, %s35
      %s52 = sphi 0, %s54
      %s55 = sphi 0, %s52
      %s56 = sphi 0, %s55
      %s72 = sphi 0, %s56
      %s76 = sphi 0, %s76
      %s78 = sphi 0, %s76
      %s79 = sphi 0, %s78
      %s93 = sphi 0, %s79
      %s97 = sphi 0, %s97
      %s99 = sphi 0, %s97
      %s100 = sphi 0, %s99
      %s114 = sphi 0, %s100
      %s118 = sphi 0, %s118
      %s120 = sphi 0, %s118
      %s121 = sphi 0, %s120
      %s135 = sphi 0, %s121
      %s143 = sphi 0, %s145
      %s146 = sphi 0, %s143
      %s147 = sphi 0, %s146
      %s163 = sphi 0, %s147
      %s171 = sphi 0, %s173
      %s174 = sphi 0, %s171
      %s175 = sphi 0, %s174
      %s191 = sphi 0, %s175
    $region4: #{encode_forward.4} parent=1 // loop_header_branch
      %26 = sbr.rel (%p24) target = $region8
    $region5: #{encode_forward.4} parent=1 // loop_body
      %s28 = ssub.s32 %s23, 1
      %s29 = ssub.s32 %s23, 2
      %s39 = sadd.s32 1, %s32
      %p40 = scmp.ge.s32.totalorder %s39, 10
      %s41 = scalar_select %p40, 0, %s39
      %s42 = sadd.s32 1, %s31
      %s43 = scalar_select %p40, %s42, %s31
      %p44 = scmp.ge.s32.totalorder %s43, 1
      %s45 = scalar_select %p44, 0, %s43
      %s46 = sadd.s32 1, %s30
      %s47 = scalar_select %p44, %s46, %s30
      %p48 = scmp.ge.s32.totalorder %s47, 2
      %s49 = scalar_select %p48, 0, %s47
      %s50 = ssub.s32 %s30, %s49
      %p51 = scmp.eq.s32.totalorder %s50, 0
      %s53 = sadd.s32 %s52, 1
      %s54 = scalar_select %p51, %s52, %s53
      %p57 = pneg %p51
      %p58 = scmp.eq.s32.totalorder %s23, 19
      %p59 = por %p57, %p58
      %p60 = scmp.ne.s32.totalorder %s52, %s55
      %p61 = scmp.eq.s32.totalorder %s23, 0
      %p62 = por %p60, %p61
      %p63 = scmp.ne.s32.totalorder %s52, %s55
      %p64 = scmp.eq.s32.totalorder %s28, 19
      %p65 = por %p63, %p64
      %p66 = scmp.ne.s32.totalorder %s55, %s56
      %p67 = scmp.eq.s32.totalorder %s28, 0
      %p68 = por %p66, %p67
      %p69 = scmp.ne.s32.totalorder %s55, %s56
      %p70 = scmp.eq.s32.totalorder %s29, 19
      %p71 = por %p69, %p70
      %p73 = scmp.ne.s32.totalorder %s56, %s72
      %p74 = scmp.eq.s32.totalorder %s29, 0
      %p75 = por %p73, %p74
      %s77 = sadd.s32 %s76, 1
      %p80 = scmp.eq.s32.totalorder %s23, 19
      %p81 = scmp.ne.s32.totalorder %s76, %s78
      %p82 = scmp.eq.s32.totalorder %s23, 0
      %p83 = por %p81, %p82
      %p84 = scmp.ne.s32.totalorder %s76, %s78
      %p85 = scmp.eq.s32.totalorder %s28, 19
      %p86 = por %p84, %p85
      %p87 = scmp.ne.s32.totalorder %s78, %s79
      %p88 = scmp.eq.s32.totalorder %s28, 0
      %p89 = por %p87, %p88
      %p90 = scmp.ne.s32.totalorder %s78, %s79
      %p91 = scmp.eq.s32.totalorder %s29, 19
      %p92 = por %p90, %p91
      %p94 = scmp.ne.s32.totalorder %s79, %s93
      %p95 = scmp.eq.s32.totalorder %s29, 0
      %p96 = por %p94, %p95
      %s98 = sadd.s32 %s97, 1
      %p101 = scmp.eq.s32.totalorder %s23, 19
      %p102 = scmp.ne.s32.totalorder %s97, %s99
      %p103 = scmp.eq.s32.totalorder %s23, 0
      %p104 = por %p102, %p103
      %p105 = scmp.ne.s32.totalorder %s97, %s99
      %p106 = scmp.eq.s32.totalorder %s28, 19
      %p107 = por %p105, %p106
      %p108 = scmp.ne.s32.totalorder %s99, %s100
      %p109 = scmp.eq.s32.totalorder %s28, 0
      %p110 = por %p108, %p109
      %p111 = scmp.ne.s32.totalorder %s99, %s100
      %p112 = scmp.eq.s32.totalorder %s29, 19
      %p113 = por %p111, %p112
      %p115 = scmp.ne.s32.totalorder %s100, %s114
      %p116 = scmp.eq.s32.totalorder %s29, 0
      %p117 = por %p115, %p116
      %s119 = sadd.s32 %s118, 1
      %p122 = scmp.eq.s32.totalorder %s23, 19
      %p123 = scmp.ne.s32.totalorder %s118, %s120
      %p124 = scmp.eq.s32.totalorder %s23, 0
      %p125 = por %p123, %p124
      %p126 = scmp.ne.s32.totalorder %s118, %s120
      %p127 = scmp.eq.s32.totalorder %s28, 19
      %p128 = por %p126, %p127
      %p129 = scmp.ne.s32.totalorder %s120, %s121
      %p130 = scmp.eq.s32.totalorder %s28, 0
      %p131 = por %p129, %p130
      %p132 = scmp.ne.s32.totalorder %s120, %s121
      %p133 = scmp.eq.s32.totalorder %s29, 19
      %p134 = por %p132, %p133
      %p136 = scmp.ne.s32.totalorder %s121, %s135
      %p137 = scmp.eq.s32.totalorder %s29, 0
      %p138 = por %p136, %p137
      %s139 = sadd.s32 %s30, %s31
      %s140 = sadd.s32 %s49, %s45
      %s141 = ssub.s32 %s139, %s140
      %p142 = scmp.eq.s32.totalorder %s141, 0
      %s144 = sadd.s32 %s143, 1
      %s145 = scalar_select %p142, %s143, %s144
      %p148 = pneg %p142
      %p149 = scmp.eq.s32.totalorder %s23, 19
      %p150 = por %p148, %p149
      %p151 = scmp.ne.s32.totalorder %s143, %s146
      %p152 = scmp.eq.s32.totalorder %s23, 0
      %p153 = por %p151, %p152
      %p154 = scmp.ne.s32.totalorder %s143, %s146
      %p155 = scmp.eq.s32.totalorder %s28, 19
      %p156 = por %p154, %p155
      %p157 = scmp.ne.s32.totalorder %s146, %s147
      %p158 = scmp.eq.s32.totalorder %s28, 0
      %p159 = por %p157, %p158
      %p160 = scmp.ne.s32.totalorder %s146, %s147
      %p161 = scmp.eq.s32.totalorder %s29, 19
      %p162 = por %p160, %p161
      %p164 = scmp.ne.s32.totalorder %s147, %s163
      %p165 = scmp.eq.s32.totalorder %s29, 0
      %p166 = por %p164, %p165
      %s167 = sadd.s32 %s30, %s31
      %s168 = sadd.s32 %s49, %s45
      %s169 = ssub.s32 %s167, %s168
      %p170 = scmp.eq.s32.totalorder %s169, 0
      %s172 = sadd.s32 %s171, 1
      %s173 = scalar_select %p170, %s171, %s172
      %p176 = pneg %p170
      %p177 = scmp.eq.s32.totalorder %s23, 19
      %p178 = por %p176, %p177
      %p179 = scmp.ne.s32.totalorder %s171, %s174
      %p180 = scmp.eq.s32.totalorder %s23, 0
      %p181 = por %p179, %p180
      %p182 = scmp.ne.s32.totalorder %s171, %s174
      %p183 = scmp.eq.s32.totalorder %s28, 19
      %p184 = por %p182, %p183
      %p185 = scmp.ne.s32.totalorder %s174, %s175
      %p186 = scmp.eq.s32.totalorder %s28, 0
      %p187 = por %p185, %p186
      %p188 = scmp.ne.s32.totalorder %s174, %s175
      %p189 = scmp.eq.s32.totalorder %s29, 19
      %p190 = por %p188, %p189
      %p192 = scmp.ne.s32.totalorder %s175, %s191
      %p193 = scmp.eq.s32.totalorder %s29, 0
      %p194 = por %p192, %p193
      %p195 = scmp.le.s32.totalorder 1, %s23
      %p196 = scmp.lt.s32.totalorder %s23, 21
      %p197 = pnand %p195, %p196
      %p198 = pneg %p197
      // Predicated region
      $region9: #{encode_forward.4} parent=5 // pred_check
        _
      $region10: #{encode_forward.4} parent=5 // pred_check_branch
        %200 = sbr.rel (%p197) target = $region12
      $region11: #{encode_forward.4} parent=5 // pred_region
        %s201 = ssub.s32 %s23, 1
        // Predicated region
        $region13: #{encode_forward.4} parent=11 // pred_check
          %p202 = pneg %p89
        $region14: #{encode_forward.4} parent=11 // pred_check_branch
          %204 = sbr.rel (%p202) target = $region16
        $region15: #{encode_forward.4} parent=11 // pred_region
          %s206 = ssub.s32 204800, 204800
          %207 = vsyncadd [#allocation8], %s206
          %s208 = sshll.u32 [#allocation7], 4
          %s209 = int_to_ptr.vmem [resolvable:$true] %s208
          %214 = dma.hbm_to_vmem [thread:$0]  %s1, 204800, %s209, [#allocation8], 128, 128, 8
        $region16: #{encode_forward.4} parent=11 // pred_fallthru
          _
        // Predicated region
        $region17: #{encode_forward.4} parent=11 // pred_check
          %p215 = pneg %p110
        $region18: #{encode_forward.4} parent=11 // pred_check_branch
          %217 = sbr.rel (%p215) target = $region20
        $region19: #{encode_forward.4} parent=11 // pred_region
          %s219 = ssub.s32 16, 16
          %220 = vsyncadd [#allocation8], %s219
          %s222 = sshll.u32 [#allocation9], 4
          %s223 = int_to_ptr.vmem [resolvable:$true] %s222
          %225 = dma.hbm_to_vmem [thread:$0]  %s2, 16, %s223, [#allocation8]
        $region20: #{encode_forward.4} parent=11 // pred_fallthru
          _
        // Predicated region
        $region21: #{encode_forward.4} parent=11 // pred_check
          %p226 = pneg %p131
        $region22: #{encode_forward.4} parent=11 // pred_check_branch
          %228 = sbr.rel (%p226) target = $region24
        $region23: #{encode_forward.4} parent=11 // pred_region
          %s230 = ssub.s32 16, 16
          %231 = vsyncadd [#allocation11], %s230
          %s233 = sshll.u32 [#allocation10], 4
          %s234 = int_to_ptr.vmem [resolvable:$true] %s233
          %236 = dma.hbm_to_vmem [thread:$0]  %s3, 16, %s234, [#allocation11]
        $region24: #{encode_forward.4} parent=11 // pred_fallthru
          _
      $region12: #{encode_forward.4} parent=5 // pred_fallthru
        _
      %p237 = scmp.lt.s32.totalorder %s23, 20
      // Predicated region
      $region25: #{encode_forward.4} parent=5 // pred_check
        %p238 = pneg %p237
      $region26: #{encode_forward.4} parent=5 // pred_check_branch
        %240 = sbr.rel (%p238) target = $region28
      $region27: #{encode_forward.4} parent=5 // pred_region
        // Predicated region
        $region29: #{encode_forward.4} parent=27 // pred_check
          %p241 = pneg %p62
        $region30: #{encode_forward.4} parent=27 // pred_check_branch
          %243 = sbr.rel (%p241) target = $region32
        $region31: #{encode_forward.4} parent=27 // pred_region
          %s244 = sand.u32 %s52, 1
          %s245 = scalar_lea.sflag [#allocation5], %s244
          %s246 = sand.u32 %s52, 1
          %s247 = smul.addr %s246, 64
          %s248 = scalar_lea.vmem [#allocation4], %s247
          %s250 = ssub.s32 1024, 1024
          %251 = vsyncadd %s245, %s250
          %s252 = smul.addr %s30, 8
          %s253 = smul.addr %s252, 128
          %s254 = scalar_lea.hbm %s0, %s253
          %s255 = sshll.u32 %s248, 4
          %s256 = int_to_ptr.vmem [resolvable:$true] %s255
          %261 = dma.hbm_to_vmem [thread:$0]  %s254, 1024, %s256, %s245, 128, 128, 8
        $region32: #{encode_forward.4} parent=27 // pred_fallthru
          _
      $region28: #{encode_forward.4} parent=5 // pred_fallthru
        _
      %p262 = scmp.le.s32.totalorder 1, %s23
      %p263 = scmp.lt.s32.totalorder %s23, 21
      %p264 = pnand %p262, %p263
      %p265 = pneg %p264
      // Predicated region
      $region33: #{encode_forward.4} parent=5 // pred_check
        _
      $region34: #{encode_forward.4} parent=5 // pred_check_branch
        %267 = sbr.rel (%p264) target = $region36
      $region35: #{encode_forward.4} parent=5 // pred_region
        %s268 = ssub.s32 %s23, 1
        %s269 = sand.u32 %s55, 1
        %s270 = scalar_lea.sflag [#allocation5], %s269
        %s271 = sand.u32 %s55, 1
        %s272 = smul.addr %s271, 64
        %s273 = scalar_lea.vmem [#allocation4], %s272
        // Predicated region
        $region37: #{encode_forward.4} parent=35 // pred_check
          %p274 = pneg %p68
        $region38: #{encode_forward.4} parent=35 // pred_check_branch
          %276 = sbr.rel (%p274) target = $region40
        $region39: #{encode_forward.4} parent=35 // pred_region
          %277 = dma.done %s270, 1024
        $region40: #{encode_forward.4} parent=35 // pred_fallthru
          _
        // Predicated region
        $region41: #{encode_forward.4} parent=35 // pred_check
          %p278 = pneg %p89
        $region42: #{encode_forward.4} parent=35 // pred_check_branch
          %280 = sbr.rel (%p278) target = $region44
        $region43: #{encode_forward.4} parent=35 // pred_region
          %281 = dma.done [#allocation8], 204800
        $region44: #{encode_forward.4} parent=35 // pred_fallthru
          _
        // Predicated region
        $region45: #{encode_forward.4} parent=35 // pred_check
          %p282 = pneg %p110
        $region46: #{encode_forward.4} parent=35 // pred_check_branch
          %284 = sbr.rel (%p282) target = $region48
        $region47: #{encode_forward.4} parent=35 // pred_region
          %285 = dma.done [#allocation8], 16
        $region48: #{encode_forward.4} parent=35 // pred_fallthru
          _
        // Predicated region
        $region49: #{encode_forward.4} parent=35 // pred_check
          %p286 = pneg %p131
        $region50: #{encode_forward.4} parent=35 // pred_check_branch
          %288 = sbr.rel (%p286) target = $region52
        $region51: #{encode_forward.4} parent=35 // pred_region
          %289 = dma.done [#allocation11], 16
        $region52: #{encode_forward.4} parent=35 // pred_fallthru
          _
        %s290 = sand.u32 %s55, 1
        %s291 = scalar_lea.sflag [#allocation5], %s290
        %s292 = sand.u32 %s55, 1
        %s293 = smul.addr %s292, 64
        %s294 = scalar_lea.vmem [#allocation4], %s293
        %p295 = pneg %p68
        %p296 = pneg %p65
        %p297 = pneg %p89
        %p298 = pneg %p86
        %p299 = pneg %p110
        %p300 = pneg %p107
        %p301 = pneg %p131
        %p302 = pneg %p128
        %p303 = pneg %p159
        %p304 = pneg %p156
        %s305 = sand.u32 %s146, 1
        %s306 = scalar_lea.sflag [#allocation6], %s305
        %s307 = sand.u32 %s146, 1
        %s308 = smul.addr %s307, 64
        %s309 = scalar_lea.vmem [#allocation12], %s308
        %p310 = pneg %p187
        %p311 = pneg %p184
        %s312 = sand.u32 %s174, 1
        %s313 = scalar_lea.sflag [#allocation14], %s312
        %s314 = sand.u32 %s174, 1
        %s315 = smul.addr %s314, 8
        %s316 = scalar_lea.vmem [#allocation13], %s315
        %s317 = sadd.s32 %s33, %s34
        %s318 = sadd.s32 %s33, %s34
        %p319 = scmp.eq.s32.totalorder %s34, 0
        %p320 = scmp.eq.s32.totalorder %s35, 0
        %p321 = pnand %p319, %p320
        %p322 = pneg %p321
        // Predicated region
        $region53: #{encode_forward.4} parent=35 // pred_check
          _
        $region54: #{encode_forward.4} parent=35 // pred_check_branch
          %324 = sbr.rel (%p321) target = $region56
        $region55: #{encode_forward.4} parent=35 // pred_region
          %325 = vst [vmem:[#allocation2] sm:$0xff] 0.0
          %326 = vst [vmem:[#allocation2 + $0x8] sm:$0xff] 0.0
          %327 = vst [vmem:[#allocation2 + $0x10] sm:$0xff] 0.0
          %328 = vst [vmem:[#allocation2 + $0x18] sm:$0x3] 0.0
          %329 = vst [vmem:[#allocation2 + $0x20] sm:$0xff] 0.0
          %330 = vst [vmem:[#allocation2 + $0x28] sm:$0xff] 0.0
          %331 = vst [vmem:[#allocation2 + $0x30] sm:$0xff] 0.0
          %332 = vst [vmem:[#allocation2 + $0x38] sm:$0x3] 0.0
          %333 = vst [vmem:[#allocation2 + $0x40] sm:$0xff] 0.0
          %334 = vst [vmem:[#allocation2 + $0x48] sm:$0xff] 0.0
          %335 = vst [vmem:[#allocation2 + $0x50] sm:$0xff] 0.0
          %336 = vst [vmem:[#allocation2 + $0x58] sm:$0x3] 0.0
          %337 = vst [vmem:[#allocation2 + $0x60] sm:$0xff] 0.0
          %338 = vst [vmem:[#allocation2 + $0x68] sm:$0xff] 0.0
          %339 = vst [vmem:[#allocation2 + $0x70] sm:$0xff] 0.0
          %340 = vst [vmem:[#allocation2 + $0x78] sm:$0x3] 0.0
          %341 = vst [vmem:[#allocation2 + $0x80] sm:$0xff] 0.0
          %342 = vst [vmem:[#allocation2 + $0x88] sm:$0xff] 0.0
          %343 = vst [vmem:[#allocation2 + $0x90] sm:$0xff] 0.0
          %344 = vst [vmem:[#allocation2 + $0x98] sm:$0x3] 0.0
          %345 = vst [vmem:[#allocation2 + $0xa0] sm:$0xff] 0.0
          %346 = vst [vmem:[#allocation2 + $0xa8] sm:$0xff] 0.0
          %347 = vst [vmem:[#allocation2 + $0xb0] sm:$0xff] 0.0
          %348 = vst [vmem:[#allocation2 + $0xb8] sm:$0x3] 0.0
          %349 = vst [vmem:[#allocation2 + $0xc0] sm:$0xff] 0.0
          %350 = vst [vmem:[#allocation2 + $0xc8] sm:$0xff] 0.0
          %351 = vst [vmem:[#allocation2 + $0xd0] sm:$0xff] 0.0
          %352 = vst [vmem:[#allocation2 + $0xd8] sm:$0x3] 0.0
          %353 = vst [vmem:[#allocation2 + $0xe0] sm:$0xff] 0.0
          %354 = vst [vmem:[#allocation2 + $0xe8] sm:$0xff] 0.0
          %355 = vst [vmem:[#allocation2 + $0xf0] sm:$0xff] 0.0
          %356 = vst [vmem:[#allocation2 + $0xf8] sm:$0x3] 0.0
          %357 = vst [vmem:[#allocation2 + $0x100] sm:$0xff] 0.0
          %358 = vst [vmem:[#allocation2 + $0x108] sm:$0xff] 0.0
          %359 = vst [vmem:[#allocation2 + $0x110] sm:$0xff] 0.0
          %360 = vst [vmem:[#allocation2 + $0x118] sm:$0x3] 0.0
          %361 = vst [vmem:[#allocation2 + $0x120] sm:$0xff] 0.0
          %362 = vst [vmem:[#allocation2 + $0x128] sm:$0xff] 0.0
          %363 = vst [vmem:[#allocation2 + $0x130] sm:$0xff] 0.0
          %364 = vst [vmem:[#allocation2 + $0x138] sm:$0x3] 0.0
          %365 = vst [vmem:[#allocation2 + $0x140] sm:$0xff] 0.0
          %366 = vst [vmem:[#allocation2 + $0x148] sm:$0xff] 0.0
          %367 = vst [vmem:[#allocation2 + $0x150] sm:$0xff] 0.0
          %368 = vst [vmem:[#allocation2 + $0x158] sm:$0x3] 0.0
          %369 = vst [vmem:[#allocation2 + $0x160] sm:$0xff] 0.0
          %370 = vst [vmem:[#allocation2 + $0x168] sm:$0xff] 0.0
          %371 = vst [vmem:[#allocation2 + $0x170] sm:$0xff] 0.0
          %372 = vst [vmem:[#allocation2 + $0x178] sm:$0x3] 0.0
          %373 = vst [vmem:[#allocation2 + $0x180] sm:$0xff] 0.0
          %374 = vst [vmem:[#allocation2 + $0x188] sm:$0xff] 0.0
          %375 = vst [vmem:[#allocation2 + $0x190] sm:$0xff] 0.0
          %376 = vst [vmem:[#allocation2 + $0x198] sm:$0x3] 0.0
          %377 = vst [vmem:[#allocation2 + $0x1a0] sm:$0xff] 0.0
          %378 = vst [vmem:[#allocation2 + $0x1a8] sm:$0xff] 0.0
          %379 = vst [vmem:[#allocation2 + $0x1b0] sm:$0xff] 0.0
          %380 = vst [vmem:[#allocation2 + $0x1b8] sm:$0x3] 0.0
          %381 = vst [vmem:[#allocation2 + $0x1c0] sm:$0xff] 0.0
          %382 = vst [vmem:[#allocation2 + $0x1c8] sm:$0xff] 0.0
          %383 = vst [vmem:[#allocation2 + $0x1d0] sm:$0xff] 0.0
          %384 = vst [vmem:[#allocation2 + $0x1d8] sm:$0x3] 0.0
          %385 = vst [vmem:[#allocation2 + $0x1e0] sm:$0xff] 0.0
          %386 = vst [vmem:[#allocation2 + $0x1e8] sm:$0xff] 0.0
          %387 = vst [vmem:[#allocation2 + $0x1f0] sm:$0xff] 0.0
          %388 = vst [vmem:[#allocation2 + $0x1f8] sm:$0x3] 0.0
          %389 = vst [vmem:[#allocation2 + $0x200] sm:$0xff] 0.0
          %390 = vst [vmem:[#allocation2 + $0x208] sm:$0xff] 0.0
          %391 = vst [vmem:[#allocation2 + $0x210] sm:$0xff] 0.0
          %392 = vst [vmem:[#allocation2 + $0x218] sm:$0x3] 0.0
          %393 = vst [vmem:[#allocation2 + $0x220] sm:$0xff] 0.0
          %394 = vst [vmem:[#allocation2 + $0x228] sm:$0xff] 0.0
          %395 = vst [vmem:[#allocation2 + $0x230] sm:$0xff] 0.0
          %396 = vst [vmem:[#allocation2 + $0x238] sm:$0x3] 0.0
          %397 = vst [vmem:[#allocation2 + $0x240] sm:$0xff] 0.0
          %398 = vst [vmem:[#allocation2 + $0x248] sm:$0xff] 0.0
          %399 = vst [vmem:[#allocation2 + $0x250] sm:$0xff] 0.0
          %400 = vst [vmem:[#allocation2 + $0x258] sm:$0x3] 0.0
          %401 = vst [vmem:[#allocation2 + $0x260] sm:$0xff] 0.0
          %402 = vst [vmem:[#allocation2 + $0x268] sm:$0xff] 0.0
          %403 = vst [vmem:[#allocation2 + $0x270] sm:$0xff] 0.0
          %404 = vst [vmem:[#allocation2 + $0x278] sm:$0x3] 0.0
          %405 = vst [vmem:[#allocation2 + $0x280] sm:$0xff] 0.0
          %406 = vst [vmem:[#allocation2 + $0x288] sm:$0xff] 0.0
          %407 = vst [vmem:[#allocation2 + $0x290] sm:$0xff] 0.0
          %408 = vst [vmem:[#allocation2 + $0x298] sm:$0x3] 0.0
          %409 = vst [vmem:[#allocation2 + $0x2a0] sm:$0xff] 0.0
          %410 = vst [vmem:[#allocation2 + $0x2a8] sm:$0xff] 0.0
          %411 = vst [vmem:[#allocation2 + $0x2b0] sm:$0xff] 0.0
          %412 = vst [vmem:[#allocation2 + $0x2b8] sm:$0x3] 0.0
          %413 = vst [vmem:[#allocation2 + $0x2c0] sm:$0xff] 0.0
          %414 = vst [vmem:[#allocation2 + $0x2c8] sm:$0xff] 0.0
          %415 = vst [vmem:[#allocation2 + $0x2d0] sm:$0xff] 0.0
          %416 = vst [vmem:[#allocation2 + $0x2d8] sm:$0x3] 0.0
          %417 = vst [vmem:[#allocation2 + $0x2e0] sm:$0xff] 0.0
          %418 = vst [vmem:[#allocation2 + $0x2e8] sm:$0xff] 0.0
          %419 = vst [vmem:[#allocation2 + $0x2f0] sm:$0xff] 0.0
          %420 = vst [vmem:[#allocation2 + $0x2f8] sm:$0x3] 0.0
          %421 = vst [vmem:[#allocation2 + $0x300] sm:$0xff] 0.0
          %422 = vst [vmem:[#allocation2 + $0x308] sm:$0xff] 0.0
          %423 = vst [vmem:[#allocation2 + $0x310] sm:$0xff] 0.0
          %424 = vst [vmem:[#allocation2 + $0x318] sm:$0x3] 0.0
          %425 = vst [vmem:[#allocation2 + $0x320] sm:$0xff] 0.0
          %426 = vst [vmem:[#allocation2 + $0x328] sm:$0xff] 0.0
          %427 = vst [vmem:[#allocation2 + $0x330] sm:$0xff] 0.0
          %428 = vst [vmem:[#allocation2 + $0x338] sm:$0x3] 0.0
          %v429 = vld [vmem:[%s273] sm:$0xff]
          %v430 = vld [vmem:[%s273 + $0x8] sm:$0xff]
          %v431 = vld [vmem:[%s273 + $0x10] sm:$0xff]
          %v432 = vld [vmem:[%s273 + $0x18] sm:$0xff]
          %v433 = vld [vmem:[%s273 + $0x20] sm:$0xff]
          %v434 = vld [vmem:[%s273 + $0x28] sm:$0xff]
          %v435 = vld [vmem:[%s273 + $0x30] sm:$0xff]
          %v436 = vld [vmem:[%s273 + $0x38] sm:$0xff]
          %v437 = vld [vmem:[#allocation9] sm:$0x1]
          %v439 = vlaneseq
          %v440 = vshrl.u32 %v439, 7
          %v441 = vsub.s32 0, %v440
          %v442 = vrot.slane %v437, %v441
          %v444 = vmul.f32 %v429, %v442
          %v445 = vmul.f32 %v430, %v442
          %v446 = vmul.f32 %v431, %v442
          %v447 = vmul.f32 %v432, %v442
          %v448 = vmul.f32 %v433, %v442
          %v449 = vmul.f32 %v434, %v442
          %v450 = vmul.f32 %v435, %v442
          %v451 = vmul.f32 %v436, %v442
          %v452 = vld [vmem:[#allocation10] sm:$0x1]
          %v454 = vlaneseq
          %v455 = vshrl.u32 %v454, 7
          %v456 = vsub.s32 0, %v455
          %v457 = vrot.slane %v452, %v456
          %v459 = vadd.f32 %v444, %v457
          %v460 = vadd.f32 %v445, %v457
          %v461 = vadd.f32 %v446, %v457
          %v462 = vadd.f32 %v447, %v457
          %v463 = vadd.f32 %v448, %v457
          %v464 = vadd.f32 %v449, %v457
          %v465 = vadd.f32 %v450, %v457
          %v466 = vadd.f32 %v451, %v457
          %v467 = vmax.f32 %v459, 0.0
          %v468 = vmax.f32 %v460, 0.0
          %v469 = vmax.f32 %v461, 0.0
          %v470 = vmax.f32 %v462, 0.0
          %v471 = vmax.f32 %v463, 0.0
          %v472 = vmax.f32 %v464, 0.0
          %v473 = vmax.f32 %v465, 0.0
          %v474 = vmax.f32 %v466, 0.0
          %s475 = scalar_lea.vmem [#allocation2], 288
          %476 = vst [vmem:[%s475 + $0x9] sm:$0xff] %v467
          %477 = vst [vmem:[%s475 + $0x29] sm:$0xff] %v468
          %478 = vst [vmem:[%s475 + $0x49] sm:$0xff] %v469
          %479 = vst [vmem:[%s475 + $0x69] sm:$0xff] %v470
          %480 = vst [vmem:[%s475 + $0x89] sm:$0xff] %v471
          %481 = vst [vmem:[%s475 + $0xa9] sm:$0xff] %v472
          %482 = vst [vmem:[%s475 + $0xc9] sm:$0xff] %v473
          %483 = vst [vmem:[%s475 + $0xe9] sm:$0xff] %v474
        $region56: #{encode_forward.4} parent=35 // pred_fallthru
          _
        %s484 = smul.u32 %s34, 8
        %s485 = smul.u32 %s35, 2
        %s486 = sadd.s32 %s484, %s485
        %s487 = smul.u32 %s486, 32
        %s488 = scalar_lea.vmem [#allocation2], %s487
        %v489 = vld [vmem:[%s488] sm:$0xff]
        %v490 = vld [vmem:[%s488 + $0x8] sm:$0xff]
        %v491 = vld [vmem:[%s488 + $0x10] sm:$0xff]
        %v492 = vld [vmem:[%s488 + $0x18] sm:$0x3]
        %v493 = vld [vmem:[%s488 + $0x20] sm:$0xff]
        %v494 = vld [vmem:[%s488 + $0x28] sm:$0xff]
        %v495 = vld [vmem:[%s488 + $0x30] sm:$0xff]
        %v496 = vld [vmem:[%s488 + $0x38] sm:$0x3]
        %v497 = vld [vmem:[%s488 + $0x40] sm:$0xff]
        %v498 = vld [vmem:[%s488 + $0x48] sm:$0xff]
        %v499 = vld [vmem:[%s488 + $0x50] sm:$0xff]
        %v500 = vld [vmem:[%s488 + $0x58] sm:$0x3]
        %v501 = vld [vmem:[%s488 + $0x60] sm:$0xff]
        %v502 = vld [vmem:[%s488 + $0x68] sm:$0xff]
        %v503 = vld [vmem:[%s488 + $0x70] sm:$0xff]
        %v504 = vld [vmem:[%s488 + $0x78] sm:$0x3]
        %v505 = vld [vmem:[%s488 + $0x80] sm:$0xff]
        %v506 = vld [vmem:[%s488 + $0x88] sm:$0xff]
        %v507 = vld [vmem:[%s488 + $0x90] sm:$0xff]
        %v508 = vld [vmem:[%s488 + $0x98] sm:$0x3]
        %v509 = vld [vmem:[%s488 + $0xa0] sm:$0xff]
        %v510 = vld [vmem:[%s488 + $0xa8] sm:$0xff]
        %v511 = vld [vmem:[%s488 + $0xb0] sm:$0xff]
        %v512 = vld [vmem:[%s488 + $0xb8] sm:$0x3]
        %v513 = vld [vmem:[%s488 + $0xc0] sm:$0xff]
        %v514 = vld [vmem:[%s488 + $0xc8] sm:$0xff]
        %v515 = vld [vmem:[%s488 + $0xd0] sm:$0xff]
        %v516 = vld [vmem:[%s488 + $0xd8] sm:$0x3]
        %v517 = vld [vmem:[%s488 + $0xe0] sm:$0xff]
        %v518 = vld [vmem:[%s488 + $0xe8] sm:$0xff]
        %v519 = vld [vmem:[%s488 + $0xf0] sm:$0xff]
        %v520 = vld [vmem:[%s488 + $0xf8] sm:$0x3]
        %521 = vst [vmem:[#allocation3] sm:$0xff] %v489
        %522 = vst [vmem:[#allocation3 + $0x50] sm:$0xff] %v493
        %523 = vst [vmem:[#allocation3 + $0xa0] sm:$0xff] %v497
        %524 = vst [vmem:[#allocation3 + $0xf0] sm:$0xff] %v501
        %525 = vst [vmem:[#allocation3 + $0x140] sm:$0xff] %v505
        %526 = vst [vmem:[#allocation3 + $0x190] sm:$0xff] %v509
        %527 = vst [vmem:[#allocation3 + $0x1e0] sm:$0xff] %v513
        %528 = vst [vmem:[#allocation3 + $0x230] sm:$0xff] %v517
        %vm545 = vcmask 1045504
        %v546 = vrot.slane %v489, 2
        %v547 = vrot.slane %v490, 2
        %v548 = vsel %vm545, %v546, %v547
        %v549 = vrot.slane %v493, 2
        %v550 = vrot.slane %v494, 2
        %v551 = vsel %vm545, %v549, %v550
        %v552 = vrot.slane %v497, 2
        %v553 = vrot.slane %v498, 2
        %v554 = vsel %vm545, %v552, %v553
        %v555 = vrot.slane %v501, 2
        %v556 = vrot.slane %v502, 2
        %v557 = vsel %vm545, %v555, %v556
        %v558 = vrot.slane %v505, 2
        %v559 = vrot.slane %v506, 2
        %v560 = vsel %vm545, %v558, %v559
        %v561 = vrot.slane %v509, 2
        %v562 = vrot.slane %v510, 2
        %v563 = vsel %vm545, %v561, %v562
        %v564 = vrot.slane %v513, 2
        %v565 = vrot.slane %v514, 2
        %v566 = vsel %vm545, %v564, %v565
        %v567 = vrot.slane %v517, 2
        %v568 = vrot.slane %v518, 2
        %v569 = vsel %vm545, %v567, %v568
        %578 = vst [vmem:[#allocation3 + $0x8] sm:$0xff] %v548
        %579 = vst [vmem:[#allocation3 + $0x58] sm:$0xff] %v551
        %580 = vst [vmem:[#allocation3 + $0xa8] sm:$0xff] %v554
        %581 = vst [vmem:[#allocation3 + $0xf8] sm:$0xff] %v557
        %582 = vst [vmem:[#allocation3 + $0x148] sm:$0xff] %v560
        %583 = vst [vmem:[#allocation3 + $0x198] sm:$0xff] %v563
        %584 = vst [vmem:[#allocation3 + $0x1e8] sm:$0xff] %v566
        %585 = vst [vmem:[#allocation3 + $0x238] sm:$0xff] %v569
        %vm586 = vcmask 1043456
        %v587 = vrot.slane %v489, 4
        %v588 = vrot.slane %v490, 4
        %v589 = vsel %vm586, %v587, %v588
        %v590 = vrot.slane %v493, 4
        %v591 = vrot.slane %v494, 4
        %v592 = vsel %vm586, %v590, %v591
        %v593 = vrot.slane %v497, 4
        %v594 = vrot.slane %v498, 4
        %v595 = vsel %vm586, %v593, %v594
        %v596 = vrot.slane %v501, 4
        %v597 = vrot.slane %v502, 4
        %v598 = vsel %vm586, %v596, %v597
        %v599 = vrot.slane %v505, 4
        %v600 = vrot.slane %v506, 4
        %v601 = vsel %vm586, %v599, %v600
        %v602 = vrot.slane %v509, 4
        %v603 = vrot.slane %v510, 4
        %v604 = vsel %vm586, %v602, %v603
        %v605 = vrot.slane %v513, 4
        %v606 = vrot.slane %v514, 4
        %v607 = vsel %vm586, %v605, %v606
        %v608 = vrot.slane %v517, 4
        %v609 = vrot.slane %v518, 4
        %v610 = vsel %vm586, %v608, %v609
        %619 = vst [vmem:[#allocation3 + $0x10] sm:$0xff] %v589
        %620 = vst [vmem:[#allocation3 + $0x60] sm:$0xff] %v592
        %621 = vst [vmem:[#allocation3 + $0xb0] sm:$0xff] %v595
        %622 = vst [vmem:[#allocation3 + $0x100] sm:$0xff] %v598
        %623 = vst [vmem:[#allocation3 + $0x150] sm:$0xff] %v601
        %624 = vst [vmem:[#allocation3 + $0x1a0] sm:$0xff] %v604
        %625 = vst [vmem:[#allocation3 + $0x1f0] sm:$0xff] %v607
        %626 = vst [vmem:[#allocation3 + $0x240] sm:$0xff] %v610
        %vm627 = vcmask 1041408
        %v628 = vrot.slane %v489, 6
        %v629 = vrot.slane %v490, 6
        %v630 = vsel %vm627, %v628, %v629
        %v631 = vrot.slane %v493, 6
        %v632 = vrot.slane %v494, 6
        %v633 = vsel %vm627, %v631, %v632
        %v634 = vrot.slane %v497, 6
        %v635 = vrot.slane %v498, 6
        %v636 = vsel %vm627, %v634, %v635
        %v637 = vrot.slane %v501, 6
        %v638 = vrot.slane %v502, 6
        %v639 = vsel %vm627, %v637, %v638
        %v640 = vrot.slane %v505, 6
        %v641 = vrot.slane %v506, 6
        %v642 = vsel %vm627, %v640, %v641
        %v643 = vrot.slane %v509, 6
        %v644 = vrot.slane %v510, 6
        %v645 = vsel %vm627, %v643, %v644
        %v646 = vrot.slane %v513, 6
        %v647 = vrot.slane %v514, 6
        %v648 = vsel %vm627, %v646, %v647
        %v649 = vrot.slane %v517, 6
        %v650 = vrot.slane %v518, 6
        %v651 = vsel %vm627, %v649, %v650
        %660 = vst [vmem:[#allocation3 + $0x18] sm:$0xff] %v630
        %661 = vst [vmem:[#allocation3 + $0x68] sm:$0xff] %v633
        %662 = vst [vmem:[#allocation3 + $0xb8] sm:$0xff] %v636
        %663 = vst [vmem:[#allocation3 + $0x108] sm:$0xff] %v639
        %664 = vst [vmem:[#allocation3 + $0x158] sm:$0xff] %v642
        %665 = vst [vmem:[#allocation3 + $0x1a8] sm:$0xff] %v645
        %666 = vst [vmem:[#allocation3 + $0x1f8] sm:$0xff] %v648
        %667 = vst [vmem:[#allocation3 + $0x248] sm:$0xff] %v651
        %668 = vst [vmem:[#allocation3 + $0x20] sm:$0xff] %v490
        %669 = vst [vmem:[#allocation3 + $0x70] sm:$0xff] %v494
        %670 = vst [vmem:[#allocation3 + $0xc0] sm:$0xff] %v498
        %671 = vst [vmem:[#allocation3 + $0x110] sm:$0xff] %v502
        %672 = vst [vmem:[#allocation3 + $0x160] sm:$0xff] %v506
        %673 = vst [vmem:[#allocation3 + $0x1b0] sm:$0xff] %v510
        %674 = vst [vmem:[#allocation3 + $0x200] sm:$0xff] %v514
        %675 = vst [vmem:[#allocation3 + $0x250] sm:$0xff] %v518
        %v684 = vrot.slane %v491, 2
        %v685 = vsel %vm545, %v547, %v684
        %v686 = vrot.slane %v495, 2
        %v687 = vsel %vm545, %v550, %v686
        %v688 = vrot.slane %v499, 2
        %v689 = vsel %vm545, %v553, %v688
        %v690 = vrot.slane %v503, 2
        %v691 = vsel %vm545, %v556, %v690
        %v692 = vrot.slane %v507, 2
        %v693 = vsel %vm545, %v559, %v692
        %v694 = vrot.slane %v511, 2
        %v695 = vsel %vm545, %v562, %v694
        %v696 = vrot.slane %v515, 2
        %v697 = vsel %vm545, %v565, %v696
        %v698 = vrot.slane %v519, 2
        %v699 = vsel %vm545, %v568, %v698
        %708 = vst [vmem:[#allocation3 + $0x28] sm:$0xff] %v685
        %709 = vst [vmem:[#allocation3 + $0x78] sm:$0xff] %v687
        %710 = vst [vmem:[#allocation3 + $0xc8] sm:$0xff] %v689
        %711 = vst [vmem:[#allocation3 + $0x118] sm:$0xff] %v691
        %712 = vst [vmem:[#allocation3 + $0x168] sm:$0xff] %v693
        %713 = vst [vmem:[#allocation3 + $0x1b8] sm:$0xff] %v695
        %714 = vst [vmem:[#allocation3 + $0x208] sm:$0xff] %v697
        %715 = vst [vmem:[#allocation3 + $0x258] sm:$0xff] %v699
        %v716 = vrot.slane %v491, 4
        %v717 = vsel %vm586, %v588, %v716
        %v718 = vrot.slane %v495, 4
        %v719 = vsel %vm586, %v591, %v718
        %v720 = vrot.slane %v499, 4
        %v721 = vsel %vm586, %v594, %v720
        %v722 = vrot.slane %v503, 4
        %v723 = vsel %vm586, %v597, %v722
        %v724 = vrot.slane %v507, 4
        %v725 = vsel %vm586, %v600, %v724
        %v726 = vrot.slane %v511, 4
        %v727 = vsel %vm586, %v603, %v726
        %v728 = vrot.slane %v515, 4
        %v729 = vsel %vm586, %v606, %v728
        %v730 = vrot.slane %v519, 4
        %v731 = vsel %vm586, %v609, %v730
        %740 = vst [vmem:[#allocation3 + $0x30] sm:$0xff] %v717
        %741 = vst [vmem:[#allocation3 + $0x80] sm:$0xff] %v719
        %742 = vst [vmem:[#allocation3 + $0xd0] sm:$0xff] %v721
        %743 = vst [vmem:[#allocation3 + $0x120] sm:$0xff] %v723
        %744 = vst [vmem:[#allocation3 + $0x170] sm:$0xff] %v725
        %745 = vst [vmem:[#allocation3 + $0x1c0] sm:$0xff] %v727
        %746 = vst [vmem:[#allocation3 + $0x210] sm:$0xff] %v729
        %747 = vst [vmem:[#allocation3 + $0x260] sm:$0xff] %v731
        %v748 = vrot.slane %v491, 6
        %v749 = vsel %vm627, %v629, %v748
        %v750 = vrot.slane %v495, 6
        %v751 = vsel %vm627, %v632, %v750
        %v752 = vrot.slane %v499, 6
        %v753 = vsel %vm627, %v635, %v752
        %v754 = vrot.slane %v503, 6
        %v755 = vsel %vm627, %v638, %v754
        %v756 = vrot.slane %v507, 6
        %v757 = vsel %vm627, %v641, %v756
        %v758 = vrot.slane %v511, 6
        %v759 = vsel %vm627, %v644, %v758
        %v760 = vrot.slane %v515, 6
        %v761 = vsel %vm627, %v647, %v760
        %v762 = vrot.slane %v519, 6
        %v763 = vsel %vm627, %v650, %v762
        %772 = vst [vmem:[#allocation3 + $0x38] sm:$0xff] %v749
        %773 = vst [vmem:[#allocation3 + $0x88] sm:$0xff] %v751
        %774 = vst [vmem:[#allocation3 + $0xd8] sm:$0xff] %v753
        %775 = vst [vmem:[#allocation3 + $0x128] sm:$0xff] %v755
        %776 = vst [vmem:[#allocation3 + $0x178] sm:$0xff] %v757
        %777 = vst [vmem:[#allocation3 + $0x1c8] sm:$0xff] %v759
        %778 = vst [vmem:[#allocation3 + $0x218] sm:$0xff] %v761
        %779 = vst [vmem:[#allocation3 + $0x268] sm:$0xff] %v763
        %780 = vst [vmem:[#allocation3 + $0x40] sm:$0xff] %v491
        %781 = vst [vmem:[#allocation3 + $0x90] sm:$0xff] %v495
        %782 = vst [vmem:[#allocation3 + $0xe0] sm:$0xff] %v499
        %783 = vst [vmem:[#allocation3 + $0x130] sm:$0xff] %v503
        %784 = vst [vmem:[#allocation3 + $0x180] sm:$0xff] %v507
        %785 = vst [vmem:[#allocation3 + $0x1d0] sm:$0xff] %v511
        %786 = vst [vmem:[#allocation3 + $0x220] sm:$0xff] %v515
        %787 = vst [vmem:[#allocation3 + $0x270] sm:$0xff] %v519
        %v796 = vrot.slane %v492, 2
        %v797 = vsel %vm545, %v684, %v796
        %v798 = vrot.slane %v496, 2
        %v799 = vsel %vm545, %v686, %v798
        %v800 = vrot.slane %v500, 2
        %v801 = vsel %vm545, %v688, %v800
        %v802 = vrot.slane %v504, 2
        %v803 = vsel %vm545, %v690, %v802
        %v804 = vrot.slane %v508, 2
        %v805 = vsel %vm545, %v692, %v804
        %v806 = vrot.slane %v512, 2
        %v807 = vsel %vm545, %v694, %v806
        %v808 = vrot.slane %v516, 2
        %v809 = vsel %vm545, %v696, %v808
        %v810 = vrot.slane %v520, 2
        %v811 = vsel %vm545, %v698, %v810
        %820 = vst [vmem:[#allocation3 + $0x48] sm:$0xff] %v797
        %821 = vst [vmem:[#allocation3 + $0x98] sm:$0xff] %v799
        %822 = vst [vmem:[#allocation3 + $0xe8] sm:$0xff] %v801
        %823 = vst [vmem:[#allocation3 + $0x138] sm:$0xff] %v803
        %824 = vst [vmem:[#allocation3 + $0x188] sm:$0xff] %v805
        %825 = vst [vmem:[#allocation3 + $0x1d8] sm:$0xff] %v807
        %826 = vst [vmem:[#allocation3 + $0x228] sm:$0xff] %v809
        %827 = vst [vmem:[#allocation3 + $0x278] sm:$0xff] %v811
        %v828 = vld [vmem:[#allocation3] sm:$0xff]
        %v829 = vld [vmem:[#allocation3 + $0x8] sm:$0xff]
        %v830 = vld [vmem:[#allocation3 + $0x10] sm:$0xff]
        %v831 = vld [vmem:[#allocation3 + $0x18] sm:$0xff]
        %v832 = vld [vmem:[#allocation3 + $0x20] sm:$0xff]
        %v833 = vld [vmem:[#allocation3 + $0x28] sm:$0xff]
        %v834 = vld [vmem:[#allocation3 + $0x30] sm:$0xff]
        %v835 = vld [vmem:[#allocation3 + $0x38] sm:$0xff]
        %v836 = vld [vmem:[#allocation3 + $0x40] sm:$0xff]
        %v837 = vld [vmem:[#allocation3 + $0x48] sm:$0xff]
        %v838 = vld [vmem:[#allocation3 + $0x50] sm:$0xff]
        %v839 = vld [vmem:[#allocation3 + $0x58] sm:$0xff]
        %v840 = vld [vmem:[#allocation3 + $0x60] sm:$0xff]
        %v841 = vld [vmem:[#allocation3 + $0x68] sm:$0xff]
        %v842 = vld [vmem:[#allocation3 + $0x70] sm:$0xff]
        %v843 = vld [vmem:[#allocation3 + $0x78] sm:$0xff]
        %v844 = vld [vmem:[#allocation3 + $0x80] sm:$0xff]
        %v845 = vld [vmem:[#allocation3 + $0x88] sm:$0xff]
        %v846 = vld [vmem:[#allocation3 + $0x90] sm:$0xff]
        %v847 = vld [vmem:[#allocation3 + $0x98] sm:$0xff]
        %v848 = vld [vmem:[#allocation3 + $0xa0] sm:$0xff]
        %v849 = vld [vmem:[#allocation3 + $0xa8] sm:$0xff]
        %v850 = vld [vmem:[#allocation3 + $0xb0] sm:$0xff]
        %v851 = vld [vmem:[#allocation3 + $0xb8] sm:$0xff]
        %v852 = vld [vmem:[#allocation3 + $0xc0] sm:$0xff]
        %v853 = vld [vmem:[#allocation3 + $0xc8] sm:$0xff]
        %v854 = vld [vmem:[#allocation3 + $0xd0] sm:$0xff]
        %v855 = vld [vmem:[#allocation3 + $0xd8] sm:$0xff]
        %v856 = vld [vmem:[#allocation3 + $0xe0] sm:$0xff]
        %v857 = vld [vmem:[#allocation3 + $0xe8] sm:$0xff]
        %v858 = vld [vmem:[#allocation3 + $0xf0] sm:$0xff]
        %v859 = vld [vmem:[#allocation3 + $0xf8] sm:$0xff]
        %v860 = vld [vmem:[#allocation3 + $0x100] sm:$0xff]
        %v861 = vld [vmem:[#allocation3 + $0x108] sm:$0xff]
        %v862 = vld [vmem:[#allocation3 + $0x110] sm:$0xff]
        %v863 = vld [vmem:[#allocation3 + $0x118] sm:$0xff]
        %v864 = vld [vmem:[#allocation3 + $0x120] sm:$0xff]
        %v865 = vld [vmem:[#allocation3 + $0x128] sm:$0xff]
        %v866 = vld [vmem:[#allocation3 + $0x130] sm:$0xff]
        %v867 = vld [vmem:[#allocation3 + $0x138] sm:$0xff]
        %v868 = vld [vmem:[#allocation3 + $0x140] sm:$0xff]
        %v869 = vld [vmem:[#allocation3 + $0x148] sm:$0xff]
        %v870 = vld [vmem:[#allocation3 + $0x150] sm:$0xff]
        %v871 = vld [vmem:[#allocation3 + $0x158] sm:$0xff]
        %v872 = vld [vmem:[#allocation3 + $0x160] sm:$0xff]
        %v873 = vld [vmem:[#allocation3 + $0x168] sm:$0xff]
        %v874 = vld [vmem:[#allocation3 + $0x170] sm:$0xff]
        %v875 = vld [vmem:[#allocation3 + $0x178] sm:$0xff]
        %v876 = vld [vmem:[#allocation3 + $0x180] sm:$0xff]
        %v877 = vld [vmem:[#allocation3 + $0x188] sm:$0xff]
        %v878 = vld [vmem:[#allocation3 + $0x190] sm:$0xff]
        %v879 = vld [vmem:[#allocation3 + $0x198] sm:$0xff]
        %v880 = vld [vmem:[#allocation3 + $0x1a0] sm:$0xff]
        %v881 = vld [vmem:[#allocation3 + $0x1a8] sm:$0xff]
        %v882 = vld [vmem:[#allocation3 + $0x1b0] sm:$0xff]
        %v883 = vld [vmem:[#allocation3 + $0x1b8] sm:$0xff]
        %v884 = vld [vmem:[#allocation3 + $0x1c0] sm:$0xff]
        %v885 = vld [vmem:[#allocation3 + $0x1c8] sm:$0xff]
        %v886 = vld [vmem:[#allocation3 + $0x1d0] sm:$0xff]
        %v887 = vld [vmem:[#allocation3 + $0x1d8] sm:$0xff]
        %v888 = vld [vmem:[#allocation3 + $0x1e0] sm:$0xff]
        %v889 = vld [vmem:[#allocation3 + $0x1e8] sm:$0xff]
        %v890 = vld [vmem:[#allocation3 + $0x1f0] sm:$0xff]
        %v891 = vld [vmem:[#allocation3 + $0x1f8] sm:$0xff]
        %v892 = vld [vmem:[#allocation3 + $0x200] sm:$0xff]
        %v893 = vld [vmem:[#allocation3 + $0x208] sm:$0xff]
        %v894 = vld [vmem:[#allocation3 + $0x210] sm:$0xff]
        %v895 = vld [vmem:[#allocation3 + $0x218] sm:$0xff]
        %v896 = vld [vmem:[#allocation3 + $0x220] sm:$0xff]
        %v897 = vld [vmem:[#allocation3 + $0x228] sm:$0xff]
        %v898 = vld [vmem:[#allocation3 + $0x230] sm:$0xff]
        %v899 = vld [vmem:[#allocation3 + $0x238] sm:$0xff]
        %v900 = vld [vmem:[#allocation3 + $0x240] sm:$0xff]
        %v901 = vld [vmem:[#allocation3 + $0x248] sm:$0xff]
        %v902 = vld [vmem:[#allocation3 + $0x250] sm:$0xff]
        %v903 = vld [vmem:[#allocation3 + $0x258] sm:$0xff]
        %v904 = vld [vmem:[#allocation3 + $0x260] sm:$0xff]
        %v905 = vld [vmem:[#allocation3 + $0x268] sm:$0xff]
        %v906 = vld [vmem:[#allocation3 + $0x270] sm:$0xff]
        %v907 = vld [vmem:[#allocation3 + $0x278] sm:$0xff]
        %s908 = smul.u32 %s35, 1280
        %s909 = scalar_lea.vmem [#allocation7], %s908
        %v910 = vld [vmem:[%s909] sm:$0xff]
        %v911 = vld [vmem:[%s909 + $0x8] sm:$0xff]
        %v912 = vld [vmem:[%s909 + $0x10] sm:$0xff]
        %v913 = vld [vmem:[%s909 + $0x18] sm:$0xff]
        %v914 = vld [vmem:[%s909 + $0x20] sm:$0xff]
        %v915 = vld [vmem:[%s909 + $0x28] sm:$0xff]
        %v916 = vld [vmem:[%s909 + $0x30] sm:$0xff]
        %v917 = vld [vmem:[%s909 + $0x38] sm:$0xff]
        %v918 = vld [vmem:[%s909 + $0x40] sm:$0xff]
        %v919 = vld [vmem:[%s909 + $0x48] sm:$0xff]
        %v920 = vld [vmem:[%s909 + $0x50] sm:$0xff]
        %v921 = vld [vmem:[%s909 + $0x58] sm:$0xff]
        %v922 = vld [vmem:[%s909 + $0x60] sm:$0xff]
        %v923 = vld [vmem:[%s909 + $0x68] sm:$0xff]
        %v924 = vld [vmem:[%s909 + $0x70] sm:$0xff]
        %v925 = vld [vmem:[%s909 + $0x78] sm:$0xff]
        %v926 = vld [vmem:[%s909 + $0x80] sm:$0xff]
        %v927 = vld [vmem:[%s909 + $0x88] sm:$0xff]
        %v928 = vld [vmem:[%s909 + $0x90] sm:$0xff]
        %v929 = vld [vmem:[%s909 + $0x98] sm:$0xff]
        %v930 = vld [vmem:[%s909 + $0xa0] sm:$0xff]
        %v931 = vld [vmem:[%s909 + $0xa8] sm:$0xff]
        %v932 = vld [vmem:[%s909 + $0xb0] sm:$0xff]
        %v933 = vld [vmem:[%s909 + $0xb8] sm:$0xff]
        %v934 = vld [vmem:[%s909 + $0xc0] sm:$0xff]
        %v935 = vld [vmem:[%s909 + $0xc8] sm:$0xff]
        %v936 = vld [vmem:[%s909 + $0xd0] sm:$0xff]
        %v937 = vld [vmem:[%s909 + $0xd8] sm:$0xff]
        %v938 = vld [vmem:[%s909 + $0xe0] sm:$0xff]
        %v939 = vld [vmem:[%s909 + $0xe8] sm:$0xff]
        %v940 = vld [vmem:[%s909 + $0xf0] sm:$0xff]
        %v941 = vld [vmem:[%s909 + $0xf8] sm:$0xff]
        %v942 = vld [vmem:[%s909 + $0x100] sm:$0xff]
        %v943 = vld [vmem:[%s909 + $0x108] sm:$0xff]
        %v944 = vld [vmem:[%s909 + $0x110] sm:$0xff]
        %v945 = vld [vmem:[%s909 + $0x118] sm:$0xff]
        %v946 = vld [vmem:[%s909 + $0x120] sm:$0xff]
        %v947 = vld [vmem:[%s909 + $0x128] sm:$0xff]
        %v948 = vld [vmem:[%s909 + $0x130] sm:$0xff]
        %v949 = vld [vmem:[%s909 + $0x138] sm:$0xff]
        %v950 = vld [vmem:[%s909 + $0x140] sm:$0xff]
        %v951 = vld [vmem:[%s909 + $0x148] sm:$0xff]
        %v952 = vld [vmem:[%s909 + $0x150] sm:$0xff]
        %v953 = vld [vmem:[%s909 + $0x158] sm:$0xff]
        %v954 = vld [vmem:[%s909 + $0x160] sm:$0xff]
        %v955 = vld [vmem:[%s909 + $0x168] sm:$0xff]
        %v956 = vld [vmem:[%s909 + $0x170] sm:$0xff]
        %v957 = vld [vmem:[%s909 + $0x178] sm:$0xff]
        %v958 = vld [vmem:[%s909 + $0x180] sm:$0xff]
        %v959 = vld [vmem:[%s909 + $0x188] sm:$0xff]
        %v960 = vld [vmem:[%s909 + $0x190] sm:$0xff]
        %v961 = vld [vmem:[%s909 + $0x198] sm:$0xff]
        %v962 = vld [vmem:[%s909 + $0x1a0] sm:$0xff]
        %v963 = vld [vmem:[%s909 + $0x1a8] sm:$0xff]
        %v964 = vld [vmem:[%s909 + $0x1b0] sm:$0xff]
        %v965 = vld [vmem:[%s909 + $0x1b8] sm:$0xff]
        %v966 = vld [vmem:[%s909 + $0x1c0] sm:$0xff]
        %v967 = vld [vmem:[%s909 + $0x1c8] sm:$0xff]
        %v968 = vld [vmem:[%s909 + $0x1d0] sm:$0xff]
        %v969 = vld [vmem:[%s909 + $0x1d8] sm:$0xff]
        %v970 = vld [vmem:[%s909 + $0x1e0] sm:$0xff]
        %v971 = vld [vmem:[%s909 + $0x1e8] sm:$0xff]
        %v972 = vld [vmem:[%s909 + $0x1f0] sm:$0xff]
        %v973 = vld [vmem:[%s909 + $0x1f8] sm:$0xff]
        %v974 = vld [vmem:[%s909 + $0x200] sm:$0xff]
        %v975 = vld [vmem:[%s909 + $0x208] sm:$0xff]
        %v976 = vld [vmem:[%s909 + $0x210] sm:$0xff]
        %v977 = vld [vmem:[%s909 + $0x218] sm:$0xff]
        %v978 = vld [vmem:[%s909 + $0x220] sm:$0xff]
        %v979 = vld [vmem:[%s909 + $0x228] sm:$0xff]
        %v980 = vld [vmem:[%s909 + $0x230] sm:$0xff]
        %v981 = vld [vmem:[%s909 + $0x238] sm:$0xff]
        %v982 = vld [vmem:[%s909 + $0x240] sm:$0xff]
        %v983 = vld [vmem:[%s909 + $0x248] sm:$0xff]
        %v984 = vld [vmem:[%s909 + $0x250] sm:$0xff]
        %v985 = vld [vmem:[%s909 + $0x258] sm:$0xff]
        %v986 = vld [vmem:[%s909 + $0x260] sm:$0xff]
        %v987 = vld [vmem:[%s909 + $0x268] sm:$0xff]
        %v988 = vld [vmem:[%s909 + $0x270] sm:$0xff]
        %v989 = vld [vmem:[%s909 + $0x278] sm:$0xff]
        %v990 = vld [vmem:[%s909 + $0x280] sm:$0xff]
        %v991 = vld [vmem:[%s909 + $0x288] sm:$0xff]
        %v992 = vld [vmem:[%s909 + $0x290] sm:$0xff]
        %v993 = vld [vmem:[%s909 + $0x298] sm:$0xff]
        %v994 = vld [vmem:[%s909 + $0x2a0] sm:$0xff]
        %v995 = vld [vmem:[%s909 + $0x2a8] sm:$0xff]
        %v996 = vld [vmem:[%s909 + $0x2b0] sm:$0xff]
        %v997 = vld [vmem:[%s909 + $0x2b8] sm:$0xff]
        %v998 = vld [vmem:[%s909 + $0x2c0] sm:$0xff]
        %v999 = vld [vmem:[%s909 + $0x2c8] sm:$0xff]
        %v1000 = vld [vmem:[%s909 + $0x2d0] sm:$0xff]
        %v1001 = vld [vmem:[%s909 + $0x2d8] sm:$0xff]
        %v1002 = vld [vmem:[%s909 + $0x2e0] sm:$0xff]
        %v1003 = vld [vmem:[%s909 + $0x2e8] sm:$0xff]
        %v1004 = vld [vmem:[%s909 + $0x2f0] sm:$0xff]
        %v1005 = vld [vmem:[%s909 + $0x2f8] sm:$0xff]
        %v1006 = vld [vmem:[%s909 + $0x300] sm:$0xff]
        %v1007 = vld [vmem:[%s909 + $0x308] sm:$0xff]
        %v1008 = vld [vmem:[%s909 + $0x310] sm:$0xff]
        %v1009 = vld [vmem:[%s909 + $0x318] sm:$0xff]
        %v1010 = vld [vmem:[%s909 + $0x320] sm:$0xff]
        %v1011 = vld [vmem:[%s909 + $0x328] sm:$0xff]
        %v1012 = vld [vmem:[%s909 + $0x330] sm:$0xff]
        %v1013 = vld [vmem:[%s909 + $0x338] sm:$0xff]
        %v1014 = vld [vmem:[%s909 + $0x340] sm:$0xff]
        %v1015 = vld [vmem:[%s909 + $0x348] sm:$0xff]
        %v1016 = vld [vmem:[%s909 + $0x350] sm:$0xff]
        %v1017 = vld [vmem:[%s909 + $0x358] sm:$0xff]
        %v1018 = vld [vmem:[%s909 + $0x360] sm:$0xff]
        %v1019 = vld [vmem:[%s909 + $0x368] sm:$0xff]
        %v1020 = vld [vmem:[%s909 + $0x370] sm:$0xff]
        %v1021 = vld [vmem:[%s909 + $0x378] sm:$0xff]
        %v1022 = vld [vmem:[%s909 + $0x380] sm:$0xff]
        %v1023 = vld [vmem:[%s909 + $0x388] sm:$0xff]
        %v1024 = vld [vmem:[%s909 + $0x390] sm:$0xff]
        %v1025 = vld [vmem:[%s909 + $0x398] sm:$0xff]
        %v1026 = vld [vmem:[%s909 + $0x3a0] sm:$0xff]
        %v1027 = vld [vmem:[%s909 + $0x3a8] sm:$0xff]
        %v1028 = vld [vmem:[%s909 + $0x3b0] sm:$0xff]
        %v1029 = vld [vmem:[%s909 + $0x3b8] sm:$0xff]
        %v1030 = vld [vmem:[%s909 + $0x3c0] sm:$0xff]
        %v1031 = vld [vmem:[%s909 + $0x3c8] sm:$0xff]
        %v1032 = vld [vmem:[%s909 + $0x3d0] sm:$0xff]
        %v1033 = vld [vmem:[%s909 + $0x3d8] sm:$0xff]
        %v1034 = vld [vmem:[%s909 + $0x3e0] sm:$0xff]
        %v1035 = vld [vmem:[%s909 + $0x3e8] sm:$0xff]
        %v1036 = vld [vmem:[%s909 + $0x3f0] sm:$0xff]
        %v1037 = vld [vmem:[%s909 + $0x3f8] sm:$0xff]
        %v1038 = vld [vmem:[%s909 + $0x400] sm:$0xff]
        %v1039 = vld [vmem:[%s909 + $0x408] sm:$0xff]
        %v1040 = vld [vmem:[%s909 + $0x410] sm:$0xff]
        %v1041 = vld [vmem:[%s909 + $0x418] sm:$0xff]
        %v1042 = vld [vmem:[%s909 + $0x420] sm:$0xff]
        %v1043 = vld [vmem:[%s909 + $0x428] sm:$0xff]
        %v1044 = vld [vmem:[%s909 + $0x430] sm:$0xff]
        %v1045 = vld [vmem:[%s909 + $0x438] sm:$0xff]
        %v1046 = vld [vmem:[%s909 + $0x440] sm:$0xff]
        %v1047 = vld [vmem:[%s909 + $0x448] sm:$0xff]
        %v1048 = vld [vmem:[%s909 + $0x450] sm:$0xff]
        %v1049 = vld [vmem:[%s909 + $0x458] sm:$0xff]
        %v1050 = vld [vmem:[%s909 + $0x460] sm:$0xff]
        %v1051 = vld [vmem:[%s909 + $0x468] sm:$0xff]
        %v1052 = vld [vmem:[%s909 + $0x470] sm:$0xff]
        %v1053 = vld [vmem:[%s909 + $0x478] sm:$0xff]
        %v1054 = vld [vmem:[%s909 + $0x480] sm:$0xff]
        %v1055 = vld [vmem:[%s909 + $0x488] sm:$0xff]
        %v1056 = vld [vmem:[%s909 + $0x490] sm:$0xff]
        %v1057 = vld [vmem:[%s909 + $0x498] sm:$0xff]
        %v1058 = vld [vmem:[%s909 + $0x4a0] sm:$0xff]
        %v1059 = vld [vmem:[%s909 + $0x4a8] sm:$0xff]
        %v1060 = vld [vmem:[%s909 + $0x4b0] sm:$0xff]
        %v1061 = vld [vmem:[%s909 + $0x4b8] sm:$0xff]
        %v1062 = vld [vmem:[%s909 + $0x4c0] sm:$0xff]
        %v1063 = vld [vmem:[%s909 + $0x4c8] sm:$0xff]
        %v1064 = vld [vmem:[%s909 + $0x4d0] sm:$0xff]
        %v1065 = vld [vmem:[%s909 + $0x4d8] sm:$0xff]
        %v1066 = vld [vmem:[%s909 + $0x4e0] sm:$0xff]
        %v1067 = vld [vmem:[%s909 + $0x4e8] sm:$0xff]
        %v1068 = vld [vmem:[%s909 + $0x4f0] sm:$0xff]
        %v1069 = vld [vmem:[%s909 + $0x4f8] sm:$0xff]
        %1070 = vmatprep.subr.mxu0 0.0
        %1071 = vmatpush1.msra.mxu0 %v910
        %1072 = vmatprep.subr.mxu0 0.0
        %1073 = vmatpush1.msra.mxu0 %v911
        %1074 = vmatprep.subr.mxu0 0.0
        %1075 = vmatpush1.msra.mxu0 %v912
        %1076 = vmatprep.subr.mxu0 0.0
        %1077 = vmatpush1.msra.mxu0 %v913
        %1078 = vmatprep.subr.mxu0 0.0
        %1079 = vmatpush1.msra.mxu0 %v914
        %1080 = vmatprep.subr.mxu0 0.0
        %1081 = vmatpush1.msra.mxu0 %v915
        %1082 = vmatprep.subr.mxu0 0.0
        %1083 = vmatpush1.msra.mxu0 %v916
        %1084 = vmatprep.subr.mxu0 0.0
        %1085 = vmatpush1.msra.mxu0 %v917
        %1086 = vmatprep.subr.mxu0 0.0
        %1087 = vmatpush1.msra.mxu0 %v918
        %1088 = vmatprep.subr.mxu0 0.0
        %1089 = vmatpush1.msra.mxu0 %v919
        %1090 = vmatprep.subr.mxu0 0.0
        %1091 = vmatpush1.msra.mxu0 %v920
        %1092 = vmatprep.subr.mxu0 0.0
        %1093 = vmatpush1.msra.mxu0 %v921
        %1094 = vmatprep.subr.mxu0 0.0
        %1095 = vmatpush1.msra.mxu0 %v922
        %1096 = vmatprep.subr.mxu0 0.0
        %1097 = vmatpush1.msra.mxu0 %v923
        %1098 = vmatprep.subr.mxu0 0.0
        %1099 = vmatpush1.msra.mxu0 %v924
        %1100 = vmatprep.subr.mxu0 0.0
        %1101 = vmatpush1.msra.mxu0 %v925
        %1102 = vmatprep.subr.mxu0 0.0
        %1103 = vmatpush1.msra.mxu0 %v926
        %1104 = vmatprep.subr.mxu0 0.0
        %1105 = vmatpush1.msra.mxu0 %v927
        %1106 = vmatprep.subr.mxu0 0.0
        %1107 = vmatpush1.msra.mxu0 %v928
        %1108 = vmatprep.subr.mxu0 0.0
        %1109 = vmatpush1.msra.mxu0 %v929
        %1110 = vmatprep.subr.mxu0 0.0
        %1111 = vmatpush1.msra.mxu0 %v930
        %1112 = vmatprep.subr.mxu0 0.0
        %1113 = vmatpush1.msra.mxu0 %v931
        %1114 = vmatprep.subr.mxu0 0.0
        %1115 = vmatpush1.msra.mxu0 %v932
        %1116 = vmatprep.subr.mxu0 0.0
        %1117 = vmatpush1.msra.mxu0 %v933
        %1118 = vmatprep.subr.mxu0 0.0
        %1119 = vmatpush1.msra.mxu0 %v934
        %1120 = vmatprep.subr.mxu0 0.0
        %1121 = vmatpush1.msra.mxu0 %v935
        %1122 = vmatprep.subr.mxu0 0.0
        %1123 = vmatpush1.msra.mxu0 %v936
        %1124 = vmatprep.subr.mxu0 0.0
        %1125 = vmatpush1.msra.mxu0 %v937
        %1126 = vmatprep.subr.mxu0 0.0
        %1127 = vmatpush1.msra.mxu0 %v938
        %1128 = vmatprep.subr.mxu0 0.0
        %1129 = vmatpush1.msra.mxu0 %v939
        %1130 = vmatprep.subr.mxu0 0.0
        %1131 = vmatpush1.msra.mxu0 %v940
        %1132 = vmatprep.subr.mxu0 0.0
        %1133 = vmatpush1.msra.mxu0 %v941
        %1134 = vmatprep.mubr.f32.mxu0 %v829
        %1135 = vmatmul.mubr.f32.gmra.mrb[0].mxu0 %v828
        %v1136 = vpop.f32.mrb[0].mxu0
        %v1137 = vadd.f32 0.0, %v1136
        %v1138 = vpop.f32.mrb[0].mxu0
        %1139 = vmatprep.mubr.f32.mxu0 %v839
        %1140 = vmatmul.mubr.f32.gmra.mrb[0].mxu0 %v838
        %v1141 = vpop.f32.mrb[0].mxu0
        %v1142 = vadd.f32 0.0, %v1141
        %v1143 = vpop.f32.mrb[0].mxu0
        %1144 = vmatprep.mubr.f32.mxu0 %v849
        %1145 = vmatmul.mubr.f32.gmra.mrb[0].mxu0 %v848
        %v1146 = vpop.f32.mrb[0].mxu0
        %v1147 = vadd.f32 0.0, %v1146
        %v1148 = vpop.f32.mrb[0].mxu0
        %1149 = vmatprep.mubr.f32.mxu0 %v859
        %1150 = vmatmul.mubr.f32.gmra.mrb[0].mxu0 %v858
        %v1151 = vpop.f32.mrb[0].mxu0
        %v1152 = vadd.f32 0.0, %v1151
        %v1153 = vpop.f32.mrb[0].mxu0
        %1154 = vmatprep.mubr.f32.mxu0 %v869
        %1155 = vmatmul.mubr.f32.gmra.mrb[0].mxu0 %v868
        %v1156 = vpop.f32.mrb[0].mxu0
        %v1157 = vadd.f32 0.0, %v1156
        %v1158 = vpop.f32.mrb[0].mxu0
        %1159 = vmatprep.mubr.f32.mxu0 %v879
        %1160 = vmatmul.mubr.f32.gmra.mrb[0].mxu0 %v878
        %v1161 = vpop.f32.mrb[0].mxu0
        %v1162 = vadd.f32 0.0, %v1161
        %v1163 = vpop.f32.mrb[0].mxu0
        %1164 = vmatprep.mubr.f32.mxu0 %v889
        %1165 = vmatmul.mubr.f32.gmra.mrb[0].mxu0 %v888
        %v1166 = vpop.f32.mrb[0].mxu0
        %v1167 = vadd.f32 0.0, %v1166
        %v1168 = vpop.f32.mrb[0].mxu0
        %1169 = vmatprep.mubr.f32.mxu0 %v899
        %1170 = vmatmul.mubr.f32.gmra.mrb[0].mxu0 %v898
        %v1171 = vpop.f32.mrb[0].mxu0
        %v1172 = vadd.f32 0.0, %v1171
        %v1173 = vpop.f32.mrb[0].mxu0
        %1174 = vdwg.mxu0
        %1175 = vmatprep.subr.mxu0 0.0
        %1176 = vmatpush1.msra.mxu0 %v942
        %1177 = vmatprep.subr.mxu0 0.0
        %1178 = vmatpush1.msra.mxu0 %v943
        %1179 = vmatprep.subr.mxu0 0.0
        %1180 = vmatpush1.msra.mxu0 %v944
        %1181 = vmatprep.subr.mxu0 0.0
        %1182 = vmatpush1.msra.mxu0 %v945
        %1183 = vmatprep.subr.mxu0 0.0
        %1184 = vmatpush1.msra.mxu0 %v946
        %1185 = vmatprep.subr.mxu0 0.0
        %1186 = vmatpush1.msra.mxu0 %v947
        %1187 = vmatprep.subr.mxu0 0.0
        %1188 = vmatpush1.msra.mxu0 %v948
        %1189 = vmatprep.subr.mxu0 0.0
        %1190 = vmatpush1.msra.mxu0 %v949
        %1191 = vmatprep.subr.mxu0 0.0
        %1192 = vmatpush1.msra.mxu0 %v950
        %1193 = vmatprep.subr.mxu0 0.0
        %1194 = vmatpush1.msra.mxu0 %v951
        %1195 = vmatprep.subr.mxu0 0.0
        %1196 = vmatpush1.msra.mxu0 %v952
        %1197 = vmatprep.subr.mxu0 0.0
        %1198 = vmatpush1.msra.mxu0 %v953
        %1199 = vmatprep.subr.mxu0 0.0
        %1200 = vmatpush1.msra.mxu0 %v954
        %1201 = vmatprep.subr.mxu0 0.0
        %1202 = vmatpush1.msra.mxu0 %v955
        %1203 = vmatprep.subr.mxu0 0.0
        %1204 = vmatpush1.msra.mxu0 %v956
        %1205 = vmatprep.subr.mxu0 0.0
        %1206 = vmatpush1.msra.mxu0 %v957
        %1207 = vmatprep.subr.mxu0 0.0
        %1208 = vmatpush1.msra.mxu0 %v958
        %1209 = vmatprep.subr.mxu0 0.0
        %1210 = vmatpush1.msra.mxu0 %v959
        %1211 = vmatprep.subr.mxu0 0.0
        %1212 = vmatpush1.msra.mxu0 %v960
        %1213 = vmatprep.subr.mxu0 0.0
        %1214 = vmatpush1.msra.mxu0 %v961
        %1215 = vmatprep.subr.mxu0 0.0
        %1216 = vmatpush1.msra.mxu0 %v962
        %1217 = vmatprep.subr.mxu0 0.0
        %1218 = vmatpush1.msra.mxu0 %v963
        %1219 = vmatprep.subr.mxu0 0.0
        %1220 = vmatpush1.msra.mxu0 %v964
        %1221 = vmatprep.subr.mxu0 0.0
        %1222 = vmatpush1.msra.mxu0 %v965
        %1223 = vmatprep.subr.mxu0 0.0
        %1224 = vmatpush1.msra.mxu0 %v966
        %1225 = vmatprep.subr.mxu0 0.0
        %1226 = vmatpush1.msra.mxu0 %v967
        %1227 = vmatprep.subr.mxu0 0.0
        %1228 = vmatpush1.msra.mxu0 %v968
        %1229 = vmatprep.subr.mxu0 0.0
        %1230 = vmatpush1.msra.mxu0 %v969
        %1231 = vmatprep.subr.mxu0 0.0
        %1232 = vmatpush1.msra.mxu0 %v970
        %1233 = vmatprep.subr.mxu0 0.0
        %1234 = vmatpush1.msra.mxu0 %v971
        %1235 = vmatprep.subr.mxu0 0.0
        %1236 = vmatpush1.msra.mxu0 %v972
        %1237 = vmatprep.subr.mxu0 0.0
        %1238 = vmatpush1.msra.mxu0 %v973
        %1239 = vmatprep.mubr.f32.mxu0 %v831
        %1240 = vmatmul.mubr.f32.gmra.mrb[0].mxu0 %v830
        %v1241 = vpop.f32.mrb[0].mxu0
        %v1242 = vadd.f32 %v1137, %v1241
        %v1243 = vpop.f32.mrb[0].mxu0
        %1244 = vmatprep.mubr.f32.mxu0 %v841
        %1245 = vmatmul.mubr.f32.gmra.mrb[0].mxu0 %v840
        %v1246 = vpop.f32.mrb[0].mxu0
        %v1247 = vadd.f32 %v1142, %v1246
        %v1248 = vpop.f32.mrb[0].mxu0
        %1249 = vmatprep.mubr.f32.mxu0 %v851
        %1250 = vmatmul.mubr.f32.gmra.mrb[0].mxu0 %v850
        %v1251 = vpop.f32.mrb[0].mxu0
        %v1252 = vadd.f32 %v1147, %v1251
        %v1253 = vpop.f32.mrb[0].mxu0
        %1254 = vmatprep.mubr.f32.mxu0 %v861
        %1255 = vmatmul.mubr.f32.gmra.mrb[0].mxu0 %v860
        %v1256 = vpop.f32.mrb[0].mxu0
        %v1257 = vadd.f32 %v1152, %v1256
        %v1258 = vpop.f32.mrb[0].mxu0
        %1259 = vmatprep.mubr.f32.mxu0 %v871
        %1260 = vmatmul.mubr.f32.gmra.mrb[0].mxu0 %v870
        %v1261 = vpop.f32.mrb[0].mxu0
        %v1262 = vadd.f32 %v1157, %v1261
        %v1263 = vpop.f32.mrb[0].mxu0
        %1264 = vmatprep.mubr.f32.mxu0 %v881
        %1265 = vmatmul.mubr.f32.gmra.mrb[0].mxu0 %v880
        %v1266 = vpop.f32.mrb[0].mxu0
        %v1267 = vadd.f32 %v1162, %v1266
        %v1268 = vpop.f32.mrb[0].mxu0
        %1269 = vmatprep.mubr.f32.mxu0 %v891
        %1270 = vmatmul.mubr.f32.gmra.mrb[0].mxu0 %v890
        %v1271 = vpop.f32.mrb[0].mxu0
        %v1272 = vadd.f32 %v1167, %v1271
        %v1273 = vpop.f32.mrb[0].mxu0
        %1274 = vmatprep.mubr.f32.mxu0 %v901
        %1275 = vmatmul.mubr.f32.gmra.mrb[0].mxu0 %v900
        %v1276 = vpop.f32.mrb[0].mxu0
        %v1277 = vadd.f32 %v1172, %v1276
        %v1278 = vpop.f32.mrb[0].mxu0
        %1279 = vdwg.mxu0
        %1280 = vmatprep.subr.mxu0 0.0
        %1281 = vmatpush1.msra.mxu0 %v974
        %1282 = vmatprep.subr.mxu0 0.0
        %1283 = vmatpush1.msra.mxu0 %v975
        %1284 = vmatprep.subr.mxu0 0.0
        %1285 = vmatpush1.msra.mxu0 %v976
        %1286 = vmatprep.subr.mxu0 0.0
        %1287 = vmatpush1.msra.mxu0 %v977
        %1288 = vmatprep.subr.mxu0 0.0
        %1289 = vmatpush1.msra.mxu0 %v978
        %1290 = vmatprep.subr.mxu0 0.0
        %1291 = vmatpush1.msra.mxu0 %v979
        %1292 = vmatprep.subr.mxu0 0.0
        %1293 = vmatpush1.msra.mxu0 %v980
        %1294 = vmatprep.subr.mxu0 0.0
        %1295 = vmatpush1.msra.mxu0 %v981
        %1296 = vmatprep.subr.mxu0 0.0
        %1297 = vmatpush1.msra.mxu0 %v982
        %1298 = vmatprep.subr.mxu0 0.0
        %1299 = vmatpush1.msra.mxu0 %v983
        %1300 = vmatprep.subr.mxu0 0.0
        %1301 = vmatpush1.msra.mxu0 %v984
        %1302 = vmatprep.subr.mxu0 0.0
        %1303 = vmatpush1.msra.mxu0 %v985
        %1304 = vmatprep.subr.mxu0 0.0
        %1305 = vmatpush1.msra.mxu0 %v986
        %1306 = vmatprep.subr.mxu0 0.0
        %1307 = vmatpush1.msra.mxu0 %v987
        %1308 = vmatprep.subr.mxu0 0.0
        %1309 = vmatpush1.msra.mxu0 %v988
        %1310 = vmatprep.subr.mxu0 0.0
        %1311 = vmatpush1.msra.mxu0 %v989
        %1312 = vmatprep.subr.mxu0 0.0
        %1313 = vmatpush1.msra.mxu0 %v990
        %1314 = vmatprep.subr.mxu0 0.0
        %1315 = vmatpush1.msra.mxu0 %v991
        %1316 = vmatprep.subr.mxu0 0.0
        %1317 = vmatpush1.msra.mxu0 %v992
        %1318 = vmatprep.subr.mxu0 0.0
        %1319 = vmatpush1.msra.mxu0 %v993
        %1320 = vmatprep.subr.mxu0 0.0
        %1321 = vmatpush1.msra.mxu0 %v994
        %1322 = vmatprep.subr.mxu0 0.0
        %1323 = vmatpush1.msra.mxu0 %v995
        %1324 = vmatprep.subr.mxu0 0.0
        %1325 = vmatpush1.msra.mxu0 %v996
        %1326 = vmatprep.subr.mxu0 0.0
        %1327 = vmatpush1.msra.mxu0 %v997
        %1328 = vmatprep.subr.mxu0 0.0
        %1329 = vmatpush1.msra.mxu0 %v998
        %1330 = vmatprep.subr.mxu0 0.0
        %1331 = vmatpush1.msra.mxu0 %v999
        %1332 = vmatprep.subr.mxu0 0.0
        %1333 = vmatpush1.msra.mxu0 %v1000
        %1334 = vmatprep.subr.mxu0 0.0
        %1335 = vmatpush1.msra.mxu0 %v1001
        %1336 = vmatprep.subr.mxu0 0.0
        %1337 = vmatpush1.msra.mxu0 %v1002
        %1338 = vmatprep.subr.mxu0 0.0
        %1339 = vmatpush1.msra.mxu0 %v1003
        %1340 = vmatprep.subr.mxu0 0.0
        %1341 = vmatpush1.msra.mxu0 %v1004
        %1342 = vmatprep.subr.mxu0 0.0
        %1343 = vmatpush1.msra.mxu0 %v1005
        %1344 = vmatprep.mubr.f32.mxu0 %v833
        %1345 = vmatmul.mubr.f32.gmra.mrb[0].mxu0 %v832
        %v1346 = vpop.f32.mrb[0].mxu0
        %v1347 = vadd.f32 %v1242, %v1346
        %v1348 = vpop.f32.mrb[0].mxu0
        %1349 = vmatprep.mubr.f32.mxu0 %v843
        %1350 = vmatmul.mubr.f32.gmra.mrb[0].mxu0 %v842
        %v1351 = vpop.f32.mrb[0].mxu0
        %v1352 = vadd.f32 %v1247, %v1351
        %v1353 = vpop.f32.mrb[0].mxu0
        %1354 = vmatprep.mubr.f32.mxu0 %v853
        %1355 = vmatmul.mubr.f32.gmra.mrb[0].mxu0 %v852
        %v1356 = vpop.f32.mrb[0].mxu0
        %v1357 = vadd.f32 %v1252, %v1356
        %v1358 = vpop.f32.mrb[0].mxu0
        %1359 = vmatprep.mubr.f32.mxu0 %v863
        %1360 = vmatmul.mubr.f32.gmra.mrb[0].mxu0 %v862
        %v1361 = vpop.f32.mrb[0].mxu0
        %v1362 = vadd.f32 %v1257, %v1361
        %v1363 = vpop.f32.mrb[0].mxu0
        %1364 = vmatprep.mubr.f32.mxu0 %v873
        %1365 = vmatmul.mubr.f32.gmra.mrb[0].mxu0 %v872
        %v1366 = vpop.f32.mrb[0].mxu0
        %v1367 = vadd.f32 %v1262, %v1366
        %v1368 = vpop.f32.mrb[0].mxu0
        %1369 = vmatprep.mubr.f32.mxu0 %v883
        %1370 = vmatmul.mubr.f32.gmra.mrb[0].mxu0 %v882
        %v1371 = vpop.f32.mrb[0].mxu0
        %v1372 = vadd.f32 %v1267, %v1371
        %v1373 = vpop.f32.mrb[0].mxu0
        %1374 = vmatprep.mubr.f32.mxu0 %v893
        %1375 = vmatmul.mubr.f32.gmra.mrb[0].mxu0 %v892
        %v1376 = vpop.f32.mrb[0].mxu0
        %v1377 = vadd.f32 %v1272, %v1376
        %v1378 = vpop.f32.mrb[0].mxu0
        %1379 = vmatprep.mubr.f32.mxu0 %v903
        %1380 = vmatmul.mubr.f32.gmra.mrb[0].mxu0 %v902
        %v1381 = vpop.f32.mrb[0].mxu0
        %v1382 = vadd.f32 %v1277, %v1381
        %v1383 = vpop.f32.mrb[0].mxu0
        %1384 = vdwg.mxu0
        %1385 = vmatprep.subr.mxu0 0.0
        %1386 = vmatpush1.msra.mxu0 %v1006
        %1387 = vmatprep.subr.mxu0 0.0
        %1388 = vmatpush1.msra.mxu0 %v1007
        %1389 = vmatprep.subr.mxu0 0.0
        %1390 = vmatpush1.msra.mxu0 %v1008
        %1391 = vmatprep.subr.mxu0 0.0
        %1392 = vmatpush1.msra.mxu0 %v1009
        %1393 = vmatprep.subr.mxu0 0.0
        %1394 = vmatpush1.msra.mxu0 %v1010
        %1395 = vmatprep.subr.mxu0 0.0
        %1396 = vmatpush1.msra.mxu0 %v1011
        %1397 = vmatprep.subr.mxu0 0.0
        %1398 = vmatpush1.msra.mxu0 %v1012
        %1399 = vmatprep.subr.mxu0 0.0
        %1400 = vmatpush1.msra.mxu0 %v1013
        %1401 = vmatprep.subr.mxu0 0.0
        %1402 = vmatpush1.msra.mxu0 %v1014
        %1403 = vmatprep.subr.mxu0 0.0
        %1404 = vmatpush1.msra.mxu0 %v1015
        %1405 = vmatprep.subr.mxu0 0.0
        %1406 = vmatpush1.msra.mxu0 %v1016
        %1407 = vmatprep.subr.mxu0 0.0
        %1408 = vmatpush1.msra.mxu0 %v1017
        %1409 = vmatprep.subr.mxu0 0.0
        %1410 = vmatpush1.msra.mxu0 %v1018
        %1411 = vmatprep.subr.mxu0 0.0
        %1412 = vmatpush1.msra.mxu0 %v1019
        %1413 = vmatprep.subr.mxu0 0.0
        %1414 = vmatpush1.msra.mxu0 %v1020
        %1415 = vmatprep.subr.mxu0 0.0
        %1416 = vmatpush1.msra.mxu0 %v1021
        %1417 = vmatprep.subr.mxu0 0.0
        %1418 = vmatpush1.msra.mxu0 %v1022
        %1419 = vmatprep.subr.mxu0 0.0
        %1420 = vmatpush1.msra.mxu0 %v1023
        %1421 = vmatprep.subr.mxu0 0.0
        %1422 = vmatpush1.msra.mxu0 %v1024
        %1423 = vmatprep.subr.mxu0 0.0
        %1424 = vmatpush1.msra.mxu0 %v1025
        %1425 = vmatprep.subr.mxu0 0.0
        %1426 = vmatpush1.msra.mxu0 %v1026
        %1427 = vmatprep.subr.mxu0 0.0
        %1428 = vmatpush1.msra.mxu0 %v1027
        %1429 = vmatprep.subr.mxu0 0.0
        %1430 = vmatpush1.msra.mxu0 %v1028
        %1431 = vmatprep.subr.mxu0 0.0
        %1432 = vmatpush1.msra.mxu0 %v1029
        %1433 = vmatprep.subr.mxu0 0.0
        %1434 = vmatpush1.msra.mxu0 %v1030
        %1435 = vmatprep.subr.mxu0 0.0
        %1436 = vmatpush1.msra.mxu0 %v1031
        %1437 = vmatprep.subr.mxu0 0.0
        %1438 = vmatpush1.msra.mxu0 %v1032
        %1439 = vmatprep.subr.mxu0 0.0
        %1440 = vmatpush1.msra.mxu0 %v1033
        %1441 = vmatprep.subr.mxu0 0.0
        %1442 = vmatpush1.msra.mxu0 %v1034
        %1443 = vmatprep.subr.mxu0 0.0
        %1444 = vmatpush1.msra.mxu0 %v1035
        %1445 = vmatprep.subr.mxu0 0.0
        %1446 = vmatpush1.msra.mxu0 %v1036
        %1447 = vmatprep.subr.mxu0 0.0
        %1448 = vmatpush1.msra.mxu0 %v1037
        %1449 = vmatprep.mubr.f32.mxu0 %v835
        %1450 = vmatmul.mubr.f32.gmra.mrb[0].mxu0 %v834
        %v1451 = vpop.f32.mrb[0].mxu0
        %v1452 = vadd.f32 %v1347, %v1451
        %v1453 = vpop.f32.mrb[0].mxu0
        %1454 = vmatprep.mubr.f32.mxu0 %v845
        %1455 = vmatmul.mubr.f32.gmra.mrb[0].mxu0 %v844
        %v1456 = vpop.f32.mrb[0].mxu0
        %v1457 = vadd.f32 %v1352, %v1456
        %v1458 = vpop.f32.mrb[0].mxu0
        %1459 = vmatprep.mubr.f32.mxu0 %v855
        %1460 = vmatmul.mubr.f32.gmra.mrb[0].mxu0 %v854
        %v1461 = vpop.f32.mrb[0].mxu0
        %v1462 = vadd.f32 %v1357, %v1461
        %v1463 = vpop.f32.mrb[0].mxu0
        %1464 = vmatprep.mubr.f32.mxu0 %v865
        %1465 = vmatmul.mubr.f32.gmra.mrb[0].mxu0 %v864
        %v1466 = vpop.f32.mrb[0].mxu0
        %v1467 = vadd.f32 %v1362, %v1466
        %v1468 = vpop.f32.mrb[0].mxu0
        %1469 = vmatprep.mubr.f32.mxu0 %v875
        %1470 = vmatmul.mubr.f32.gmra.mrb[0].mxu0 %v874
        %v1471 = vpop.f32.mrb[0].mxu0
        %v1472 = vadd.f32 %v1367, %v1471
        %v1473 = vpop.f32.mrb[0].mxu0
        %1474 = vmatprep.mubr.f32.mxu0 %v885
        %1475 = vmatmul.mubr.f32.gmra.mrb[0].mxu0 %v884
        %v1476 = vpop.f32.mrb[0].mxu0
        %v1477 = vadd.f32 %v1372, %v1476
        %v1478 = vpop.f32.mrb[0].mxu0
        %1479 = vmatprep.mubr.f32.mxu0 %v895
        %1480 = vmatmul.mubr.f32.gmra.mrb[0].mxu0 %v894
        %v1481 = vpop.f32.mrb[0].mxu0
        %v1482 = vadd.f32 %v1377, %v1481
        %v1483 = vpop.f32.mrb[0].mxu0
        %1484 = vmatprep.mubr.f32.mxu0 %v905
        %1485 = vmatmul.mubr.f32.gmra.mrb[0].mxu0 %v904
        %v1486 = vpop.f32.mrb[0].mxu0
        %v1487 = vadd.f32 %v1382, %v1486
        %v1488 = vpop.f32.mrb[0].mxu0
        %1489 = vdwg.mxu0
        %1490 = vmatprep.subr.mxu0 0.0
        %1491 = vmatpush1.msra.mxu0 %v1038
        %1492 = vmatprep.subr.mxu0 0.0
        %1493 = vmatpush1.msra.mxu0 %v1039
        %1494 = vmatprep.subr.mxu0 0.0
        %1495 = vmatpush1.msra.mxu0 %v1040
        %1496 = vmatprep.subr.mxu0 0.0
        %1497 = vmatpush1.msra.mxu0 %v1041
        %1498 = vmatprep.subr.mxu0 0.0
        %1499 = vmatpush1.msra.mxu0 %v1042
        %1500 = vmatprep.subr.mxu0 0.0
        %1501 = vmatpush1.msra.mxu0 %v1043
        %1502 = vmatprep.subr.mxu0 0.0
        %1503 = vmatpush1.msra.mxu0 %v1044
        %1504 = vmatprep.subr.mxu0 0.0
        %1505 = vmatpush1.msra.mxu0 %v1045
        %1506 = vmatprep.subr.mxu0 0.0
        %1507 = vmatpush1.msra.mxu0 %v1046
        %1508 = vmatprep.subr.mxu0 0.0
        %1509 = vmatpush1.msra.mxu0 %v1047
        %1510 = vmatprep.subr.mxu0 0.0
        %1511 = vmatpush1.msra.mxu0 %v1048
        %1512 = vmatprep.subr.mxu0 0.0
        %1513 = vmatpush1.msra.mxu0 %v1049
        %1514 = vmatprep.subr.mxu0 0.0
        %1515 = vmatpush1.msra.mxu0 %v1050
        %1516 = vmatprep.subr.mxu0 0.0
        %1517 = vmatpush1.msra.mxu0 %v1051
        %1518 = vmatprep.subr.mxu0 0.0
        %1519 = vmatpush1.msra.mxu0 %v1052
        %1520 = vmatprep.subr.mxu0 0.0
        %1521 = vmatpush1.msra.mxu0 %v1053
        %1522 = vmatprep.subr.mxu0 0.0
        %1523 = vmatpush1.msra.mxu0 %v1054
        %1524 = vmatprep.subr.mxu0 0.0
        %1525 = vmatpush1.msra.mxu0 %v1055
        %1526 = vmatprep.subr.mxu0 0.0
        %1527 = vmatpush1.msra.mxu0 %v1056
        %1528 = vmatprep.subr.mxu0 0.0
        %1529 = vmatpush1.msra.mxu0 %v1057
        %1530 = vmatprep.subr.mxu0 0.0
        %1531 = vmatpush1.msra.mxu0 %v1058
        %1532 = vmatprep.subr.mxu0 0.0
        %1533 = vmatpush1.msra.mxu0 %v1059
        %1534 = vmatprep.subr.mxu0 0.0
        %1535 = vmatpush1.msra.mxu0 %v1060
        %1536 = vmatprep.subr.mxu0 0.0
        %1537 = vmatpush1.msra.mxu0 %v1061
        %1538 = vmatprep.subr.mxu0 0.0
        %1539 = vmatpush1.msra.mxu0 %v1062
        %1540 = vmatprep.subr.mxu0 0.0
        %1541 = vmatpush1.msra.mxu0 %v1063
        %1542 = vmatprep.subr.mxu0 0.0
        %1543 = vmatpush1.msra.mxu0 %v1064
        %1544 = vmatprep.subr.mxu0 0.0
        %1545 = vmatpush1.msra.mxu0 %v1065
        %1546 = vmatprep.subr.mxu0 0.0
        %1547 = vmatpush1.msra.mxu0 %v1066
        %1548 = vmatprep.subr.mxu0 0.0
        %1549 = vmatpush1.msra.mxu0 %v1067
        %1550 = vmatprep.subr.mxu0 0.0
        %1551 = vmatpush1.msra.mxu0 %v1068
        %1552 = vmatprep.subr.mxu0 0.0
        %1553 = vmatpush1.msra.mxu0 %v1069
        %1554 = vmatprep.mubr.f32.mxu0 %v837
        %1555 = vmatmul.mubr.f32.gmra.mrb[0].mxu0 %v836
        %v1556 = vpop.f32.mrb[0].mxu0
        %v1557 = vadd.f32 %v1452, %v1556
        %v1558 = vpop.f32.mrb[0].mxu0
        %1559 = vmatprep.mubr.f32.mxu0 %v847
        %1560 = vmatmul.mubr.f32.gmra.mrb[0].mxu0 %v846
        %v1561 = vpop.f32.mrb[0].mxu0
        %v1562 = vadd.f32 %v1457, %v1561
        %v1563 = vpop.f32.mrb[0].mxu0
        %1564 = vmatprep.mubr.f32.mxu0 %v857
        %1565 = vmatmul.mubr.f32.gmra.mrb[0].mxu0 %v856
        %v1566 = vpop.f32.mrb[0].mxu0
        %v1567 = vadd.f32 %v1462, %v1566
        %v1568 = vpop.f32.mrb[0].mxu0
        %1569 = vmatprep.mubr.f32.mxu0 %v867
        %1570 = vmatmul.mubr.f32.gmra.mrb[0].mxu0 %v866
        %v1571 = vpop.f32.mrb[0].mxu0
        %v1572 = vadd.f32 %v1467, %v1571
        %v1573 = vpop.f32.mrb[0].mxu0
        %1574 = vmatprep.mubr.f32.mxu0 %v877
        %1575 = vmatmul.mubr.f32.gmra.mrb[0].mxu0 %v876
        %v1576 = vpop.f32.mrb[0].mxu0
        %v1577 = vadd.f32 %v1472, %v1576
        %v1578 = vpop.f32.mrb[0].mxu0
        %1579 = vmatprep.mubr.f32.mxu0 %v887
        %1580 = vmatmul.mubr.f32.gmra.mrb[0].mxu0 %v886
        %v1581 = vpop.f32.mrb[0].mxu0
        %v1582 = vadd.f32 %v1477, %v1581
        %v1583 = vpop.f32.mrb[0].mxu0
        %1584 = vmatprep.mubr.f32.mxu0 %v897
        %1585 = vmatmul.mubr.f32.gmra.mrb[0].mxu0 %v896
        %v1586 = vpop.f32.mrb[0].mxu0
        %v1587 = vadd.f32 %v1482, %v1586
        %v1588 = vpop.f32.mrb[0].mxu0
        %1589 = vmatprep.mubr.f32.mxu0 %v907
        %1590 = vmatmul.mubr.f32.gmra.mrb[0].mxu0 %v906
        %v1591 = vpop.f32.mrb[0].mxu0
        %v1592 = vadd.f32 %v1487, %v1591
        %v1593 = vpop.f32.mrb[0].mxu0
        %1594 = vdwg.mxu0
        // Predicated region
        $region57: #{encode_forward.4} parent=35 // pred_check
          %p1595 = pneg %p320
        $region58: #{encode_forward.4} parent=35 // pred_check_branch
          %1597 = sbr.rel (%p1595) target = $region60
        $region59: #{encode_forward.4} parent=35 // pred_region
          %1598 = vst [vmem:[%s309] sm:$0xff] 0.0
          %1599 = vst [vmem:[%s309 + $0x8] sm:$0xff] 0.0
          %1600 = vst [vmem:[%s309 + $0x10] sm:$0xff] 0.0
          %1601 = vst [vmem:[%s309 + $0x18] sm:$0xff] 0.0
          %1602 = vst [vmem:[%s309 + $0x20] sm:$0xff] 0.0
          %1603 = vst [vmem:[%s309 + $0x28] sm:$0xff] 0.0
          %1604 = vst [vmem:[%s309 + $0x30] sm:$0xff] 0.0
          %1605 = vst [vmem:[%s309 + $0x38] sm:$0xff] 0.0
        $region60: #{encode_forward.4} parent=35 // pred_fallthru
          _
        %v1606 = vld [vmem:[%s309] sm:$0xff]
        %v1607 = vld [vmem:[%s309 + $0x8] sm:$0xff]
        %v1608 = vld [vmem:[%s309 + $0x10] sm:$0xff]
        %v1609 = vld [vmem:[%s309 + $0x18] sm:$0xff]
        %v1610 = vld [vmem:[%s309 + $0x20] sm:$0xff]
        %v1611 = vld [vmem:[%s309 + $0x28] sm:$0xff]
        %v1612 = vld [vmem:[%s309 + $0x30] sm:$0xff]
        %v1613 = vld [vmem:[%s309 + $0x38] sm:$0xff]
        %v1614 = vadd.f32 %v1606, %v1557
        %v1615 = vadd.f32 %v1607, %v1562
        %v1616 = vadd.f32 %v1608, %v1567
        %v1617 = vadd.f32 %v1609, %v1572
        %v1618 = vadd.f32 %v1610, %v1577
        %v1619 = vadd.f32 %v1611, %v1582
        %v1620 = vadd.f32 %v1612, %v1587
        %v1621 = vadd.f32 %v1613, %v1592
        %1622 = vst [vmem:[%s309] sm:$0xff] %v1614
        %1623 = vst [vmem:[%s309 + $0x8] sm:$0xff] %v1615
        %1624 = vst [vmem:[%s309 + $0x10] sm:$0xff] %v1616
        %1625 = vst [vmem:[%s309 + $0x18] sm:$0xff] %v1617
        %1626 = vst [vmem:[%s309 + $0x20] sm:$0xff] %v1618
        %1627 = vst [vmem:[%s309 + $0x28] sm:$0xff] %v1619
        %1628 = vst [vmem:[%s309 + $0x30] sm:$0xff] %v1620
        %1629 = vst [vmem:[%s309 + $0x38] sm:$0xff] %v1621
        %p1630 = scmp.eq.s32.totalorder %s35, 9
        // Predicated region
        $region61: #{encode_forward.4} parent=35 // pred_check
          %p1631 = pneg %p1630
        $region62: #{encode_forward.4} parent=35 // pred_check_branch
          %1633 = sbr.rel (%p1631) target = $region64
        $region63: #{encode_forward.4} parent=35 // pred_region
          %v1634 = vld [vmem:[%s309] sm:$0xff]
          %v1635 = vld [vmem:[%s309 + $0x8] sm:$0xff]
          %v1636 = vld [vmem:[%s309 + $0x10] sm:$0xff]
          %v1637 = vld [vmem:[%s309 + $0x18] sm:$0xff]
          %v1638 = vld [vmem:[%s309 + $0x20] sm:$0xff]
          %v1639 = vld [vmem:[%s309 + $0x28] sm:$0xff]
          %v1640 = vld [vmem:[%s309 + $0x30] sm:$0xff]
          %v1641 = vld [vmem:[%s309 + $0x38] sm:$0xff]
          %v1642 = vlaneseq
          %v1643 = vshrl.u32 %v1642, 7
          %v1644 = vadd.f32 %v1634, %v1635
          %v1645 = vadd.f32 %v1644, %v1636
          %v1646 = vadd.f32 %v1645, %v1637
          %v1647 = vadd.f32 %v1646, %v1638
          %v1648 = vadd.f32 %v1647, %v1639
          %v1649 = vadd.f32 %v1648, %v1640
          %v1650 = vadd.f32 %v1649, %v1641
          %v1651 = vrot.slane %v1650, 4
          %v1652 = vadd.f32 %v1650, %v1651
          %v1653 = vrot.slane %v1652, 2
          %v1654 = vadd.f32 %v1652, %v1653
          %v1655 = vrot.slane %v1654, 1
          %v1656 = vadd.f32 %v1654, %v1655
          %v1657 = vmul.f32 %v1634, %v1634
          %v1658 = vmul.f32 %v1635, %v1635
          %v1659 = vmul.f32 %v1636, %v1636
          %v1660 = vmul.f32 %v1637, %v1637
          %v1661 = vmul.f32 %v1638, %v1638
          %v1662 = vmul.f32 %v1639, %v1639
          %v1663 = vmul.f32 %v1640, %v1640
          %v1664 = vmul.f32 %v1641, %v1641
          %v1665 = vadd.f32 %v1657, %v1658
          %v1666 = vadd.f32 %v1665, %v1659
          %v1667 = vadd.f32 %v1666, %v1660
          %v1668 = vadd.f32 %v1667, %v1661
          %v1669 = vadd.f32 %v1668, %v1662
          %v1670 = vadd.f32 %v1669, %v1663
          %v1671 = vadd.f32 %v1670, %v1664
          %v1672 = vrot.slane %v1671, 4
          %v1673 = vadd.f32 %v1671, %v1672
          %v1674 = vrot.slane %v1673, 2
          %v1675 = vadd.f32 %v1673, %v1674
          %v1676 = vrot.slane %v1675, 1
          %v1677 = vadd.f32 %v1675, %v1676
          %vm1678 = vcmp.eq.s32.totalorder %v1643, 0
          %v1679 = vsel %vm1678, %v1656, 0.0
          %vm1680 = vcmp.eq.s32.totalorder %v1643, 1
          %v1681 = vsel %vm1680, %v1677, 0.0
          %v1682 = vadd.f32 %v1679, %v1681
          %1683 = vst [vmem:[%s316] sm:$0xff] %v1682
        $region64: #{encode_forward.4} parent=35 // pred_fallthru
          _
        %s1684 = sand.u32 %s146, 1
        %s1685 = scalar_lea.sflag [#allocation6], %s1684
        %s1686 = sand.u32 %s146, 1
        %s1687 = smul.addr %s1686, 64
        %s1688 = scalar_lea.vmem [#allocation12], %s1687
        %s1689 = sand.u32 %s174, 1
        %s1690 = scalar_lea.sflag [#allocation14], %s1689
        %s1691 = sand.u32 %s174, 1
        %s1692 = smul.addr %s1691, 8
        %s1693 = scalar_lea.vmem [#allocation13], %s1692
        // Predicated region
        $region65: #{encode_forward.4} parent=35 // pred_check
          %p1694 = pneg %p156
        $region66: #{encode_forward.4} parent=35 // pred_check_branch
          %1696 = sbr.rel (%p1694) target = $region68
        $region67: #{encode_forward.4} parent=35 // pred_region
          %s1697 = sadd.s32 %s33, %s34
          %s1699 = ssub.s32 1024, 1024
          %1700 = vsyncadd %s1685, %s1699
          %s1701 = smul.addr %s1697, 8
          %s1702 = smul.addr %s1701, 128
          %s1703 = scalar_lea.hbm %s4, %s1702
          %s1704 = sshll.u32 %s1688, 4
          %s1705 = int_to_ptr.vmem [resolvable:$true] %s1704
          %1710 = dma.vmem_to_hbm [thread:$0]  %s1705, 1024, %s1703, %s1685, 128, 128, 8
        $region68: #{encode_forward.4} parent=35 // pred_fallthru
          _
        // Predicated region
        $region69: #{encode_forward.4} parent=35 // pred_check
          %p1711 = pneg %p184
        $region70: #{encode_forward.4} parent=35 // pred_check_branch
          %1713 = sbr.rel (%p1711) target = $region72
        $region71: #{encode_forward.4} parent=35 // pred_region
          %s1714 = sadd.s32 %s33, %s34
          %s1716 = ssub.s32 128, 128
          %1717 = vsyncadd %s1690, %s1716
          %s1718 = smul.addr %s1714, 128
          %s1719 = scalar_lea.hbm %s5, %s1718
          %s1721 = sshll.u32 %s1693, 4
          %s1722 = int_to_ptr.vmem [resolvable:$true] %s1721
          %1724 = dma.vmem_to_hbm [thread:$0]  %s1722, 128, %s1719, %s1690
        $region72: #{encode_forward.4} parent=35 // pred_fallthru
          _
      $region36: #{encode_forward.4} parent=5 // pred_fallthru
        _
      %p1725 = scmp.le.s32.totalorder 2, %s23
      // Predicated region
      $region73: #{encode_forward.4} parent=5 // pred_check
        %p1726 = pneg %p1725
      $region74: #{encode_forward.4} parent=5 // pred_check_branch
        %1728 = sbr.rel (%p1726) target = $region76
      $region75: #{encode_forward.4} parent=5 // pred_region
        %s1729 = ssub.s32 %s23, 2
        // Predicated region
        $region77: #{encode_forward.4} parent=75 // pred_check
          %p1730 = pneg %p162
        $region78: #{encode_forward.4} parent=75 // pred_check_branch
          %1732 = sbr.rel (%p1730) target = $region80
        $region79: #{encode_forward.4} parent=75 // pred_region
          %s1733 = sand.u32 %s147, 1
          %s1734 = scalar_lea.sflag [#allocation6], %s1733
          %s1735 = sand.u32 %s147, 1
          %s1736 = smul.addr %s1735, 64
          %s1737 = scalar_lea.vmem [#allocation12], %s1736
          %1738 = dma.done %s1734, 1024
        $region80: #{encode_forward.4} parent=75 // pred_fallthru
          _
        // Predicated region
        $region81: #{encode_forward.4} parent=75 // pred_check
          %p1739 = pneg %p190
        $region82: #{encode_forward.4} parent=75 // pred_check_branch
          %1741 = sbr.rel (%p1739) target = $region84
        $region83: #{encode_forward.4} parent=75 // pred_region
          %s1742 = sand.u32 %s175, 1
          %s1743 = scalar_lea.sflag [#allocation14], %s1742
          %s1744 = sand.u32 %s175, 1
          %s1745 = smul.addr %s1744, 8
          %s1746 = scalar_lea.vmem [#allocation13], %s1745
          %1747 = dma.done %s1743, 128
        $region84: #{encode_forward.4} parent=75 // pred_fallthru
          _
      $region76: #{encode_forward.4} parent=5 // pred_fallthru
        _
    $region6: #{encode_forward.4} parent=1 // loop_footer
      %s27 = sadd.s32 1, %s23
    $region7: #{encode_forward.4} parent=1 // loop_footer_branch
      %22 = sbr.rel target = $region3
    $region8: #{encode_forward.4} parent=1 // loop_exit
      _
    %1748 = vsyncpa [#allocation5], 1
    %s1749 = scalar_lea.sflag [#allocation5], 1
    %1750 = vsyncpa %s1749, 1
    %1751 = vsyncpa [#allocation8], 1
    %1752 = vsyncpa [#allocation11], 1
    %1753 = vsyncpa [#allocation6], 1
    %s1754 = scalar_lea.sflag [#allocation6], 1
    %1755 = vsyncpa %s1754, 1
    %1756 = vsyncpa [#allocation14], 1
    %s1757 = scalar_lea.sflag [#allocation14], 1
    %1758 = vsyncpa %s1757, 1

// kernel: encode_forward.5
$region0: #{encode_forward.5}
  #allocation0 [shape = 'u32[]', space=smem, size = 0x4, offset = 0x4, fixed_abs, tag = 'smem constant byte address 0x4 - core index']
  #allocation1 [shape = 'u32[144,128]{1,0:T(1,128)}', space=vmem, size = 0x12000, scoped, tag = 'internal scratch']
  %s0 = inlined_call_operand.hbm [shape: f32[128,128], index: 0, kind: input, shape index: {}, may-alias: {0,3}]
  %s1 = inlined_call_operand.vmem [shape: f32[1,128], index: 1, kind: input, shape index: {}]
  %s2 = inlined_call_operand.vmem [shape: f32[1,128], index: 2, kind: input, shape index: {}]
  %s3 = inlined_call_operand.hbm [shape: f32[128,128], index: 3, kind: output, shape index: {}, may-alias: {0,3}]
  %s4 = sld [smem:[#allocation0]]
  $region26: #{encode_forward.5} parent=0
    _
  %s6 = ssub.s32 1, %s4
  %s7 = scalar_select 0, %s6, %s4
  $region1: #{encode_forward.5} parent=0
    #allocation2 [shape = 'u8[65536]{0}', space=vmem, size = 0x10000, scoped, tag = 'input window, operand 0, single buffered']
    #allocation3 [shape = 's32[1]{0}', space=sflag, size = 0x4, scoped, tag = 'scoped memory for encode_forward.5']
    #allocation4 [shape = 's32[1]{0}', space=sflag, size = 0x4, scoped, tag = 'scoped memory for encode_forward.5']
    #allocation5 [shape = 'u8[65536]{0}', space=vmem, size = 0x10000, scoped, tag = 'output window, operand 0, single buffered']
    %8 = vsyncpa [#allocation3], 0
    %9 = vsyncpa [#allocation4], 0
    // Predicated region
    $region2: #{encode_forward.5} parent=1 // pred_check
      _
    $region3: #{encode_forward.5} parent=1 // pred_check_branch
      %11 = sbr.rel (0) target = $region5
    $region4: #{encode_forward.5} parent=1 // pred_region
      %s13 = ssub.s32 2048, 2048
      %14 = vsyncadd [#allocation3], %s13
      %s15 = sshll.u32 [#allocation2], 4
      %s16 = int_to_ptr.vmem [resolvable:$true] %s15
      %21 = dma.hbm_to_vmem [thread:$0]  %s0, 2048, %s16, [#allocation3], 128, 128, 8
    $region5: #{encode_forward.5} parent=1 // pred_fallthru
      _
    // Predicated region
    $region6: #{encode_forward.5} parent=1 // pred_check
      _
    $region7: #{encode_forward.5} parent=1 // pred_check_branch
      %23 = sbr.rel (0) target = $region9
    $region8: #{encode_forward.5} parent=1 // pred_region
      _
    $region9: #{encode_forward.5} parent=1 // pred_fallthru
      _
    // Predicated region
    $region10: #{encode_forward.5} parent=1 // pred_check
      _
    $region11: #{encode_forward.5} parent=1 // pred_check_branch
      %25 = sbr.rel (0) target = $region13
    $region12: #{encode_forward.5} parent=1 // pred_region
      _
    $region13: #{encode_forward.5} parent=1 // pred_fallthru
      _
    // Predicated region
    $region14: #{encode_forward.5} parent=1 // pred_check
      _
    $region15: #{encode_forward.5} parent=1 // pred_check_branch
      %27 = sbr.rel (0) target = $region17
    $region16: #{encode_forward.5} parent=1 // pred_region
      %28 = dma.done [#allocation3], 2048
    $region17: #{encode_forward.5} parent=1 // pred_fallthru
      _
    %v29 = vld [vmem:[#allocation2] sm:$0xff]
    %v30 = vld [vmem:[#allocation2 + $0x8] sm:$0xff]
    %v31 = vld [vmem:[#allocation2 + $0x10] sm:$0xff]
    %v32 = vld [vmem:[#allocation2 + $0x18] sm:$0xff]
    %v33 = vld [vmem:[#allocation2 + $0x20] sm:$0xff]
    %v34 = vld [vmem:[#allocation2 + $0x28] sm:$0xff]
    %v35 = vld [vmem:[#allocation2 + $0x30] sm:$0xff]
    %v36 = vld [vmem:[#allocation2 + $0x38] sm:$0xff]
    %v37 = vld [vmem:[#allocation2 + $0x40] sm:$0xff]
    %v38 = vld [vmem:[#allocation2 + $0x48] sm:$0xff]
    %v39 = vld [vmem:[#allocation2 + $0x50] sm:$0xff]
    %v40 = vld [vmem:[#allocation2 + $0x58] sm:$0xff]
    %v41 = vld [vmem:[#allocation2 + $0x60] sm:$0xff]
    %v42 = vld [vmem:[#allocation2 + $0x68] sm:$0xff]
    %v43 = vld [vmem:[#allocation2 + $0x70] sm:$0xff]
    %v44 = vld [vmem:[#allocation2 + $0x78] sm:$0xff]
    %v45 = vld [vmem:[%s1] sm:$0x1]
    %v47 = vlaneseq
    %v48 = vshrl.u32 %v47, 7
    %v49 = vsub.s32 0, %v48
    %v50 = vrot.slane %v45, %v49
    %v52 = vmul.f32 %v29, %v50
    %v53 = vmul.f32 %v30, %v50
    %v54 = vmul.f32 %v31, %v50
    %v55 = vmul.f32 %v32, %v50
    %v56 = vmul.f32 %v33, %v50
    %v57 = vmul.f32 %v34, %v50
    %v58 = vmul.f32 %v35, %v50
    %v59 = vmul.f32 %v36, %v50
    %v60 = vmul.f32 %v37, %v50
    %v61 = vmul.f32 %v38, %v50
    %v62 = vmul.f32 %v39, %v50
    %v63 = vmul.f32 %v40, %v50
    %v64 = vmul.f32 %v41, %v50
    %v65 = vmul.f32 %v42, %v50
    %v66 = vmul.f32 %v43, %v50
    %v67 = vmul.f32 %v44, %v50
    %v68 = vld [vmem:[%s2] sm:$0x1]
    %v70 = vlaneseq
    %v71 = vshrl.u32 %v70, 7
    %v72 = vsub.s32 0, %v71
    %v73 = vrot.slane %v68, %v72
    %v75 = vadd.f32 %v52, %v73
    %v76 = vadd.f32 %v53, %v73
    %v77 = vadd.f32 %v54, %v73
    %v78 = vadd.f32 %v55, %v73
    %v79 = vadd.f32 %v56, %v73
    %v80 = vadd.f32 %v57, %v73
    %v81 = vadd.f32 %v58, %v73
    %v82 = vadd.f32 %v59, %v73
    %v83 = vadd.f32 %v60, %v73
    %v84 = vadd.f32 %v61, %v73
    %v85 = vadd.f32 %v62, %v73
    %v86 = vadd.f32 %v63, %v73
    %v87 = vadd.f32 %v64, %v73
    %v88 = vadd.f32 %v65, %v73
    %v89 = vadd.f32 %v66, %v73
    %v90 = vadd.f32 %v67, %v73
    %v91 = vmax.f32 %v75, 0.0
    %v92 = vmax.f32 %v76, 0.0
    %v93 = vmax.f32 %v77, 0.0
    %v94 = vmax.f32 %v78, 0.0
    %v95 = vmax.f32 %v79, 0.0
    %v96 = vmax.f32 %v80, 0.0
    %v97 = vmax.f32 %v81, 0.0
    %v98 = vmax.f32 %v82, 0.0
    %v99 = vmax.f32 %v83, 0.0
    %v100 = vmax.f32 %v84, 0.0
    %v101 = vmax.f32 %v85, 0.0
    %v102 = vmax.f32 %v86, 0.0
    %v103 = vmax.f32 %v87, 0.0
    %v104 = vmax.f32 %v88, 0.0
    %v105 = vmax.f32 %v89, 0.0
    %v106 = vmax.f32 %v90, 0.0
    %107 = vst [vmem:[#allocation5] sm:$0xff] %v91
    %108 = vst [vmem:[#allocation5 + $0x8] sm:$0xff] %v92
    %109 = vst [vmem:[#allocation5 + $0x10] sm:$0xff] %v93
    %110 = vst [vmem:[#allocation5 + $0x18] sm:$0xff] %v94
    %111 = vst [vmem:[#allocation5 + $0x20] sm:$0xff] %v95
    %112 = vst [vmem:[#allocation5 + $0x28] sm:$0xff] %v96
    %113 = vst [vmem:[#allocation5 + $0x30] sm:$0xff] %v97
    %114 = vst [vmem:[#allocation5 + $0x38] sm:$0xff] %v98
    %115 = vst [vmem:[#allocation5 + $0x40] sm:$0xff] %v99
    %116 = vst [vmem:[#allocation5 + $0x48] sm:$0xff] %v100
    %117 = vst [vmem:[#allocation5 + $0x50] sm:$0xff] %v101
    %118 = vst [vmem:[#allocation5 + $0x58] sm:$0xff] %v102
    %119 = vst [vmem:[#allocation5 + $0x60] sm:$0xff] %v103
    %120 = vst [vmem:[#allocation5 + $0x68] sm:$0xff] %v104
    %121 = vst [vmem:[#allocation5 + $0x70] sm:$0xff] %v105
    %122 = vst [vmem:[#allocation5 + $0x78] sm:$0xff] %v106
    // Predicated region
    $region18: #{encode_forward.5} parent=1 // pred_check
      _
    $region19: #{encode_forward.5} parent=1 // pred_check_branch
      %124 = sbr.rel (0) target = $region21
    $region20: #{encode_forward.5} parent=1 // pred_region
      %s126 = ssub.s32 2048, 2048
      %127 = vsyncadd [#allocation4], %s126
      %s128 = sshll.u32 [#allocation5], 4
      %s129 = int_to_ptr.vmem [resolvable:$true] %s128
      %134 = dma.vmem_to_hbm [thread:$0]  %s129, 2048, %s3, [#allocation4], 128, 128, 8
    $region21: #{encode_forward.5} parent=1 // pred_fallthru
      _
    // Predicated region
    $region22: #{encode_forward.5} parent=1 // pred_check
      _
    $region23: #{encode_forward.5} parent=1 // pred_check_branch
      %136 = sbr.rel (0) target = $region25
    $region24: #{encode_forward.5} parent=1 // pred_region
      %137 = dma.done [#allocation4], 2048
    $region25: #{encode_forward.5} parent=1 // pred_fallthru
      _
    %138 = vsyncpa [#allocation3], 1
    %139 = vsyncpa [#allocation4], 1

</llo_original>
